<compile_context>
chip_gen: v7x
topology: tpu7x:2x2x1
jax: 0.10.0
libtpu: 0.0.40
codegen_flags: <defaults>
</compile_context>

<pallas_src>
import jax
import jax.numpy as jnp
from jax.experimental import pallas as pl
from jax.experimental.pallas import tpu as pltpu


# ----------------------------- Pallas kernel -------------------------------

def notestart_kernel(x_ref, h0_ref, c0_ref, lstm_ref, head_ref, out_ref):
    """Single-program kernel: fused input projection + LSTM recurrence + MLP head.

    x_ref    : (B, S*I)      inputs, batch-major, column index = t*I + d
    h0_ref   : (B, H)        initial hidden state
    c0_ref   : (B, H)        initial cell state
    lstm_ref : (H+I+1, 4H)   rows [0,H)    = W_hh^T
                             rows [H,H+I)  = W_ih^T
                             row  H+I      = b_ih + b_hh
    head_ref : (H+3, 24)     rows [0,H) = fc1.weight^T, row H = fc1.bias,
                             row H+1 = fc2.weight (as a row), row H+2 = fc2.bias
    out_ref  : (B, 1)
    """
    B, H = h0_ref.shape
    G = 4 * H
    I = lstm_ref.shape[0] - H - 1
    S = x_ref.shape[1] // I

    xv = x_ref[...]                            # (B, S*I)  — one vreg at these shapes
    lstm = lstm_ref[...]                       # (H+I+1, 4H)
    whh = lstm[0:H, :]                         # (H, 4H)   W_hh^T
    wih = lstm[H:H + I, :]                     # (I, 4H)   W_ih^T
    bias = lstm[H + I:H + I + 1, :]            # (1, 4H)   b_ih + b_hh

    # Full-vreg activation constants, hoisted out of the recurrence.
    # sigmoid(x) = 0.5 * tanh(0.5 * x) + 0.5  for the i/f/o columns; g stays tanh.
    col = jax.lax.broadcasted_iota(jnp.int32, (1, G), 1)
    is_g = (col >= 2 * H) & (col < 3 * H)
    pre = jnp.where(is_g, 1.0, 0.5)            # also the post-scale (identical)
    off = jnp.where(is_g, 0.0, 0.5)

    # Carry h/c as values (vregs); S is static so the loop is fully unrolled.
    h = h0_ref[...]
    c = c0_ref[...]

    for t in range(S):
        # Input projection for step t: I broadcast FMAs on the VPU. Independent of
        # h, so it overlaps the recurrent MXU matmul below.
        gx = bias
        for d in range(I):
            gx = gx + xv[:, t * I + d:t * I + d + 1] * wih[d:d + 1, :]

        # TODO(synk): optional — keep W_hh weight-stationary on the MXU via
        # pltpu.matmul_push_rhs/matmul_acc_lhs/matmul_pop (verify f32 pass handling).
        gates = gx + jnp.dot(h, whh, preferred_element_type=jnp.float32)   # (B, 4H)

        # One full-vreg EUP push for all four gates.
        act = jnp.tanh(gates * pre) * pre + off                            # (B, 4H)
        i_g = act[:, 0 * H:1 * H]
        f_g = act[:, 1 * H:2 * H]
        g_g = act[:, 2 * H:3 * H]
        o_g = act[:, 3 * H:4 * H]
        c = f_g * c + i_g * g_g
        h = o_g * jnp.tanh(c)

    # MLP head on the final hidden state h_n.
    headv = head_ref[...]
    fc1w = headv[0:H, :]                       # (H, 24)
    fc1b = headv[H:H + 1, :]                   # (1, 24)
    fc2w = headv[H + 1:H + 2, :]               # (1, 24)
    fc2b = headv[H + 2:H + 3, 0:1]             # (1, 1)

    z1 = jnp.dot(h, fc1w, preferred_element_type=jnp.float32) + fc1b      # (B, 24)
    z1 = jnp.maximum(z1, 0.0)                                             # ReLU
    z2 = jnp.sum(z1 * fc2w, axis=1, keepdims=True) + fc2b                 # (B, 1)
    out_ref[...] = jnp.tanh(z2)


# ------------------------------- Wrapper ------------------------------------

@jax.jit
def notestart_forward(x, h, params):
    """x: (B, S, I) float32 (batch_first, like PyTorch); h = (h0, c0), each (1, B, H).

    Returns output of shape (1, B, 1) == tanh(fc2(relu(fc1(h_n)))).
    """
    h0, c0 = h
    B, S, I = x.shape
    H = h0.shape[-1]

    # Consolidated LSTM parameter slab: W_hh^T rows, W_ih^T rows, combined bias row.
    wih_t = params["w_ih"].T                                   # (I, 4H)
    whh_t = params["w_hh"].T                                   # (H, 4H)
    bias = (params["b_ih"] + params["b_hh"]).reshape(1, 4 * H)
    lstm_all = jnp.concatenate([whh_t, wih_t, bias], axis=0)   # (H+I+1, 4H)

    # Consolidated MLP head slab.
    fc1w_t = params["fc1_w"].T                                 # (H, 24)
    fc1b = params["fc1_b"].reshape(1, 24)
    fc2w = params["fc2_w"].reshape(1, 24)
    fc2b = jnp.broadcast_to(params["fc2_b"].reshape(1, 1), (1, 24))
    head = jnp.concatenate([fc1w_t, fc1b, fc2w, fc2b], axis=0)  # (H+3, 24)

    # Flatten time/feature into the lane dim: column index = t*I + d (contiguous reshape).
    x2 = x.reshape(B, S * I)

    vmem = pl.BlockSpec(memory_space=pltpu.MemorySpace.VMEM)
    out = pl.pallas_call(
        notestart_kernel,
        out_shape=jax.ShapeDtypeStruct((B, 1), jnp.float32),
        in_specs=[vmem] * 5,
        out_specs=vmem,
    )(x2, h0[0], c0[0], lstm_all, head)

    return out.reshape(1, B, 1)                # matches PyTorch (n_layers, B, 1)


# --------------------------- Pure-JAX reference ------------------------------

def notestart_reference(x, h, params):
    h0, c0 = h
    B, S, I = x.shape
    H = h0.shape[-1]
    h_t = h0[0]
    c_t = c0[0]
    wih_t = params["w_ih"].T
    whh_t = params["w_hh"].T
    b = params["b_ih"] + params["b_hh"]
    for t in range(S):
        gates = x[:, t, :] @ wih_t + h_t @ whh_t + b
        i_g = jax.nn.sigmoid(gates[:, 0 * H:1 * H])
        f_g = jax.nn.sigmoid(gates[:, 1 * H:2 * H])
        g_g = jnp.tanh(gates[:, 2 * H:3 * H])
        o_g = jax.nn.sigmoid(gates[:, 3 * H:4 * H])
        c_t = f_g * c_t + i_g * g_g
        h_t = o_g * jnp.tanh(c_t)
    z1 = jnp.maximum(h_t @ params["fc1_w"].T + params["fc1_b"], 0.0)
    z2 = jnp.tanh(z1 @ params["fc2_w"].T + params["fc2_b"])
    return z2.reshape(1, B, 1)


# --------------------------------- Main --------------------------------------

if __name__ == "__main__":
    # Small shapes consistent with NoteStartNet(input_dim=3, hidden_dim=H).
    B, S, I, H = 8, 8, 3, 32

    key = jax.random.PRNGKey(0)
    keys = jax.random.split(key, 10)
    k = 1.0 / jnp.sqrt(jnp.float32(H))  # PyTorch default uniform(-1/sqrt(H), 1/sqrt(H))

    params = {
        "w_ih": jax.random.uniform(keys[0], (4 * H, I), jnp.float32, -k, k),
        "w_hh": jax.random.uniform(keys[1], (4 * H, H), jnp.float32, -k, k),
        "b_ih": jax.random.uniform(keys[2], (4 * H,), jnp.float32, -k, k),
        "b_hh": jax.random.uniform(keys[3], (4 * H,), jnp.float32, -k, k),
        "fc1_w": jax.random.uniform(keys[4], (24, H), jnp.float32, -k, k),
        "fc1_b": jax.random.uniform(keys[5], (24,), jnp.float32, -k, k),
        "fc2_w": jax.random.uniform(keys[6], (1, 24), jnp.float32, -k, k),
        "fc2_b": jax.random.uniform(keys[7], (1,), jnp.float32, -k, k),
    }

    x = jax.random.normal(keys[8], (B, S, I), jnp.float32)
    # init_hidden: zeros (n_layers, batch, hidden_dim)
    h0 = jnp.zeros((1, B, H), jnp.float32)
    c0 = jnp.zeros((1, B, H), jnp.float32)

    out = notestart_forward(x, (h0, c0), params)
    out = jax.block_until_ready(out)

    ref = notestart_reference(x, (h0, c0), params)
    assert out.shape == (1, B, 1), out.shape
    assert jnp.allclose(out, ref, atol=1e-5, rtol=1e-5), (
        f"max abs err {jnp.max(jnp.abs(out - ref))}")

    print("KERNEL_OK")
</pallas_src>

<mosaic_0001>
module attributes {stable_mosaic.version = 11 : i64} {
  func.func @notestart_kernel(%arg0: memref<8x24xf32, #tpu.memory_space<vmem>>, %arg1: memref<8x32xf32, #tpu.memory_space<vmem>>, %arg2: memref<8x32xf32, #tpu.memory_space<vmem>>, %arg3: memref<36x128xf32, #tpu.memory_space<vmem>>, %arg4: memref<35x24xf32, #tpu.memory_space<vmem>>, %arg5: memref<8x1xf32, #tpu.memory_space<vmem>>) attributes {dimension_semantics = [], scalar_prefetch = 0 : i64, scratch_operands = 0 : i64, tpu.core_type = #tpu.core_type<tc>} {
    %c0 = arith.constant 0 : index
    %c0_0 = arith.constant 0 : index
    %0 = vector.load %arg0[%c0, %c0_0] : memref<8x24xf32, #tpu.memory_space<vmem>>, vector<8x24xf32>
    %c0_1 = arith.constant 0 : index
    %c0_2 = arith.constant 0 : index
    %1 = vector.load %arg3[%c0_1, %c0_2] : memref<36x128xf32, #tpu.memory_space<vmem>>, vector<36x128xf32>
    %2 = vector.extract_strided_slice %1 {offsets = [0, 0], sizes = [32, 128], strides = [1, 1]} : vector<36x128xf32> to vector<32x128xf32>
    %3 = vector.extract_strided_slice %1 {offsets = [32, 0], sizes = [3, 128], strides = [1, 1]} : vector<36x128xf32> to vector<3x128xf32>
    %4 = vector.extract_strided_slice %1 {offsets = [35, 0], sizes = [1, 128], strides = [1, 1]} : vector<36x128xf32> to vector<1x128xf32>
    %5 = tpu.iota {dimensions = array<i32: 1>} : vector<1x128xi32>
    %c64_i32 = arith.constant 64 : i32
    %6 = vector.broadcast %c64_i32 : i32 to vector<1x128xi32>
    %7 = arith.cmpi sge, %5, %6 : vector<1x128xi32>
    %c96_i32 = arith.constant 96 : i32
    %8 = vector.broadcast %c96_i32 : i32 to vector<1x128xi32>
    %9 = arith.cmpi slt, %5, %8 : vector<1x128xi32>
    %10 = arith.andi %7, %9 : vector<1x128xi1>
    %cst = arith.constant 1.000000e+00 : f32
    %cst_3 = arith.constant 5.000000e-01 : f32
    %11 = vector.broadcast %cst : f32 to vector<1x128xf32>
    %12 = vector.broadcast %cst_3 : f32 to vector<1x128xf32>
    %13 = arith.select %10, %11, %12 : vector<1x128xi1>, vector<1x128xf32>
    %cst_4 = arith.constant 0.000000e+00 : f32
    %cst_5 = arith.constant 5.000000e-01 : f32
    %14 = vector.broadcast %cst_4 : f32 to vector<1x128xf32>
    %15 = vector.broadcast %cst_5 : f32 to vector<1x128xf32>
    %16 = arith.select %10, %14, %15 : vector<1x128xi1>, vector<1x128xf32>
    %c0_6 = arith.constant 0 : index
    %c0_7 = arith.constant 0 : index
    %17 = vector.load %arg1[%c0_6, %c0_7] : memref<8x32xf32, #tpu.memory_space<vmem>>, vector<8x32xf32>
    %c0_8 = arith.constant 0 : index
    %c0_9 = arith.constant 0 : index
    %18 = vector.load %arg2[%c0_8, %c0_9] : memref<8x32xf32, #tpu.memory_space<vmem>>, vector<8x32xf32>
    %19 = vector.extract_strided_slice %0 {offsets = [0, 0], sizes = [8, 1], strides = [1, 1]} : vector<8x24xf32> to vector<8x1xf32>
    %20 = vector.extract_strided_slice %3 {offsets = [0, 0], sizes = [1, 128], strides = [1, 1]} : vector<3x128xf32> to vector<1x128xf32>
    %21 = vector.broadcast %19 : vector<8x1xf32> to vector<8x128xf32>
    %22 = vector.broadcast %20 : vector<1x128xf32> to vector<8x128xf32>
    %23 = arith.mulf %21, %22 : vector<8x128xf32>
    %24 = vector.broadcast %4 : vector<1x128xf32> to vector<8x128xf32>
    %25 = arith.addf %24, %23 : vector<8x128xf32>
    %26 = vector.extract_strided_slice %0 {offsets = [0, 1], sizes = [8, 1], strides = [1, 1]} : vector<8x24xf32> to vector<8x1xf32>
    %27 = vector.extract_strided_slice %3 {offsets = [1, 0], sizes = [1, 128], strides = [1, 1]} : vector<3x128xf32> to vector<1x128xf32>
    %28 = vector.broadcast %26 : vector<8x1xf32> to vector<8x128xf32>
    %29 = vector.broadcast %27 : vector<1x128xf32> to vector<8x128xf32>
    %30 = arith.mulf %28, %29 : vector<8x128xf32>
    %31 = arith.addf %25, %30 : vector<8x128xf32>
    %32 = vector.extract_strided_slice %0 {offsets = [0, 2], sizes = [8, 1], strides = [1, 1]} : vector<8x24xf32> to vector<8x1xf32>
    %33 = vector.extract_strided_slice %3 {offsets = [2, 0], sizes = [1, 128], strides = [1, 1]} : vector<3x128xf32> to vector<1x128xf32>
    %34 = vector.broadcast %32 : vector<8x1xf32> to vector<8x128xf32>
    %35 = vector.broadcast %33 : vector<1x128xf32> to vector<8x128xf32>
    %36 = arith.mulf %34, %35 : vector<8x128xf32>
    %37 = arith.addf %31, %36 : vector<8x128xf32>
    %cst_10 = arith.constant dense<0.000000e+00> : vector<8x128xf32>
    %38 = tpu.matmul %17, %2, %cst_10 {dimension_numbers = #tpu.dot_dimension_numbers<[1], [0], [0], [1], [0, 0, 1, 1], [], []>} : vector<8x32xf32>, vector<32x128xf32>, vector<8x128xf32> -> vector<8x128xf32>
    %39 = arith.addf %37, %38 : vector<8x128xf32>
    %40 = vector.broadcast %13 : vector<1x128xf32> to vector<8x128xf32>
    %41 = arith.mulf %39, %40 : vector<8x128xf32>
    %42 = math.tanh %41 : vector<8x128xf32>
    %43 = vector.broadcast %13 : vector<1x128xf32> to vector<8x128xf32>
    %44 = arith.mulf %42, %43 : vector<8x128xf32>
    %45 = vector.broadcast %16 : vector<1x128xf32> to vector<8x128xf32>
    %46 = arith.addf %44, %45 : vector<8x128xf32>
    %47 = vector.extract_strided_slice %46 {offsets = [0, 0], sizes = [8, 32], strides = [1, 1]} : vector<8x128xf32> to vector<8x32xf32>
    %48 = vector.extract_strided_slice %46 {offsets = [0, 32], sizes = [8, 32], strides = [1, 1]} : vector<8x128xf32> to vector<8x32xf32>
    %49 = vector.extract_strided_slice %46 {offsets = [0, 64], sizes = [8, 32], strides = [1, 1]} : vector<8x128xf32> to vector<8x32xf32>
    %50 = vector.extract_strided_slice %46 {offsets = [0, 96], sizes = [8, 32], strides = [1, 1]} : vector<8x128xf32> to vector<8x32xf32>
    %51 = arith.mulf %48, %18 : vector<8x32xf32>
    %52 = arith.mulf %47, %49 : vector<8x32xf32>
    %53 = arith.addf %51, %52 : vector<8x32xf32>
    %54 = math.tanh %53 : vector<8x32xf32>
    %55 = arith.mulf %50, %54 : vector<8x32xf32>
    %56 = vector.extract_strided_slice %0 {offsets = [0, 3], sizes = [8, 1], strides = [1, 1]} : vector<8x24xf32> to vector<8x1xf32>
    %57 = vector.extract_strided_slice %3 {offsets = [0, 0], sizes = [1, 128], strides = [1, 1]} : vector<3x128xf32> to vector<1x128xf32>
    %58 = vector.broadcast %56 : vector<8x1xf32> to vector<8x128xf32>
    %59 = vector.broadcast %57 : vector<1x128xf32> to vector<8x128xf32>
    %60 = arith.mulf %58, %59 : vector<8x128xf32>
    %61 = vector.broadcast %4 : vector<1x128xf32> to vector<8x128xf32>
    %62 = arith.addf %61, %60 : vector<8x128xf32>
    %63 = vector.extract_strided_slice %0 {offsets = [0, 4], sizes = [8, 1], strides = [1, 1]} : vector<8x24xf32> to vector<8x1xf32>
    %64 = vector.extract_strided_slice %3 {offsets = [1, 0], sizes = [1, 128], strides = [1, 1]} : vector<3x128xf32> to vector<1x128xf32>
    %65 = vector.broadcast %63 : vector<8x1xf32> to vector<8x128xf32>
    %66 = vector.broadcast %64 : vector<1x128xf32> to vector<8x128xf32>
    %67 = arith.mulf %65, %66 : vector<8x128xf32>
    %68 = arith.addf %62, %67 : vector<8x128xf32>
    %69 = vector.extract_strided_slice %0 {offsets = [0, 5], sizes = [8, 1], strides = [1, 1]} : vector<8x24xf32> to vector<8x1xf32>
    %70 = vector.extract_strided_slice %3 {offsets = [2, 0], sizes = [1, 128], strides = [1, 1]} : vector<3x128xf32> to vector<1x128xf32>
    %71 = vector.broadcast %69 : vector<8x1xf32> to vector<8x128xf32>
    %72 = vector.broadcast %70 : vector<1x128xf32> to vector<8x128xf32>
    %73 = arith.mulf %71, %72 : vector<8x128xf32>
    %74 = arith.addf %68, %73 : vector<8x128xf32>
    %cst_11 = arith.constant dense<0.000000e+00> : vector<8x128xf32>
    %75 = tpu.matmul %55, %2, %cst_11 {dimension_numbers = #tpu.dot_dimension_numbers<[1], [0], [0], [1], [0, 0, 1, 1], [], []>} : vector<8x32xf32>, vector<32x128xf32>, vector<8x128xf32> -> vector<8x128xf32>
    %76 = arith.addf %74, %75 : vector<8x128xf32>
    %77 = vector.broadcast %13 : vector<1x128xf32> to vector<8x128xf32>
    %78 = arith.mulf %76, %77 : vector<8x128xf32>
    %79 = math.tanh %78 : vector<8x128xf32>
    %80 = vector.broadcast %13 : vector<1x128xf32> to vector<8x128xf32>
    %81 = arith.mulf %79, %80 : vector<8x128xf32>
    %82 = vector.broadcast %16 : vector<1x128xf32> to vector<8x128xf32>
    %83 = arith.addf %81, %82 : vector<8x128xf32>
    %84 = vector.extract_strided_slice %83 {offsets = [0, 0], sizes = [8, 32], strides = [1, 1]} : vector<8x128xf32> to vector<8x32xf32>
    %85 = vector.extract_strided_slice %83 {offsets = [0, 32], sizes = [8, 32], strides = [1, 1]} : vector<8x128xf32> to vector<8x32xf32>
    %86 = vector.extract_strided_slice %83 {offsets = [0, 64], sizes = [8, 32], strides = [1, 1]} : vector<8x128xf32> to vector<8x32xf32>
    %87 = vector.extract_strided_slice %83 {offsets = [0, 96], sizes = [8, 32], strides = [1, 1]} : vector<8x128xf32> to vector<8x32xf32>
    %88 = arith.mulf %85, %53 : vector<8x32xf32>
    %89 = arith.mulf %84, %86 : vector<8x32xf32>
    %90 = arith.addf %88, %89 : vector<8x32xf32>
    %91 = math.tanh %90 : vector<8x32xf32>
    %92 = arith.mulf %87, %91 : vector<8x32xf32>
    %93 = vector.extract_strided_slice %0 {offsets = [0, 6], sizes = [8, 1], strides = [1, 1]} : vector<8x24xf32> to vector<8x1xf32>
    %94 = vector.extract_strided_slice %3 {offsets = [0, 0], sizes = [1, 128], strides = [1, 1]} : vector<3x128xf32> to vector<1x128xf32>
    %95 = vector.broadcast %93 : vector<8x1xf32> to vector<8x128xf32>
    %96 = vector.broadcast %94 : vector<1x128xf32> to vector<8x128xf32>
    %97 = arith.mulf %95, %96 : vector<8x128xf32>
    %98 = vector.broadcast %4 : vector<1x128xf32> to vector<8x128xf32>
    %99 = arith.addf %98, %97 : vector<8x128xf32>
    %100 = vector.extract_strided_slice %0 {offsets = [0, 7], sizes = [8, 1], strides = [1, 1]} : vector<8x24xf32> to vector<8x1xf32>
    %101 = vector.extract_strided_slice %3 {offsets = [1, 0], sizes = [1, 128], strides = [1, 1]} : vector<3x128xf32> to vector<1x128xf32>
    %102 = vector.broadcast %100 : vector<8x1xf32> to vector<8x128xf32>
    %103 = vector.broadcast %101 : vector<1x128xf32> to vector<8x128xf32>
    %104 = arith.mulf %102, %103 : vector<8x128xf32>
    %105 = arith.addf %99, %104 : vector<8x128xf32>
    %106 = vector.extract_strided_slice %0 {offsets = [0, 8], sizes = [8, 1], strides = [1, 1]} : vector<8x24xf32> to vector<8x1xf32>
    %107 = vector.extract_strided_slice %3 {offsets = [2, 0], sizes = [1, 128], strides = [1, 1]} : vector<3x128xf32> to vector<1x128xf32>
    %108 = vector.broadcast %106 : vector<8x1xf32> to vector<8x128xf32>
    %109 = vector.broadcast %107 : vector<1x128xf32> to vector<8x128xf32>
    %110 = arith.mulf %108, %109 : vector<8x128xf32>
    %111 = arith.addf %105, %110 : vector<8x128xf32>
    %cst_12 = arith.constant dense<0.000000e+00> : vector<8x128xf32>
    %112 = tpu.matmul %92, %2, %cst_12 {dimension_numbers = #tpu.dot_dimension_numbers<[1], [0], [0], [1], [0, 0, 1, 1], [], []>} : vector<8x32xf32>, vector<32x128xf32>, vector<8x128xf32> -> vector<8x128xf32>
    %113 = arith.addf %111, %112 : vector<8x128xf32>
    %114 = vector.broadcast %13 : vector<1x128xf32> to vector<8x128xf32>
    %115 = arith.mulf %113, %114 : vector<8x128xf32>
    %116 = math.tanh %115 : vector<8x128xf32>
    %117 = vector.broadcast %13 : vector<1x128xf32> to vector<8x128xf32>
    %118 = arith.mulf %116, %117 : vector<8x128xf32>
    %119 = vector.broadcast %16 : vector<1x128xf32> to vector<8x128xf32>
    %120 = arith.addf %118, %119 : vector<8x128xf32>
    %121 = vector.extract_strided_slice %120 {offsets = [0, 0], sizes = [8, 32], strides = [1, 1]} : vector<8x128xf32> to vector<8x32xf32>
    %122 = vector.extract_strided_slice %120 {offsets = [0, 32], sizes = [8, 32], strides = [1, 1]} : vector<8x128xf32> to vector<8x32xf32>
    %123 = vector.extract_strided_slice %120 {offsets = [0, 64], sizes = [8, 32], strides = [1, 1]} : vector<8x128xf32> to vector<8x32xf32>
    %124 = vector.extract_strided_slice %120 {offsets = [0, 96], sizes = [8, 32], strides = [1, 1]} : vector<8x128xf32> to vector<8x32xf32>
    %125 = arith.mulf %122, %90 : vector<8x32xf32>
    %126 = arith.mulf %121, %123 : vector<8x32xf32>
    %127 = arith.addf %125, %126 : vector<8x32xf32>
    %128 = math.tanh %127 : vector<8x32xf32>
    %129 = arith.mulf %124, %128 : vector<8x32xf32>
    %130 = vector.extract_strided_slice %0 {offsets = [0, 9], sizes = [8, 1], strides = [1, 1]} : vector<8x24xf32> to vector<8x1xf32>
    %131 = vector.extract_strided_slice %3 {offsets = [0, 0], sizes = [1, 128], strides = [1, 1]} : vector<3x128xf32> to vector<1x128xf32>
    %132 = vector.broadcast %130 : vector<8x1xf32> to vector<8x128xf32>
    %133 = vector.broadcast %131 : vector<1x128xf32> to vector<8x128xf32>
    %134 = arith.mulf %132, %133 : vector<8x128xf32>
    %135 = vector.broadcast %4 : vector<1x128xf32> to vector<8x128xf32>
    %136 = arith.addf %135, %134 : vector<8x128xf32>
    %137 = vector.extract_strided_slice %0 {offsets = [0, 10], sizes = [8, 1], strides = [1, 1]} : vector<8x24xf32> to vector<8x1xf32>
    %138 = vector.extract_strided_slice %3 {offsets = [1, 0], sizes = [1, 128], strides = [1, 1]} : vector<3x128xf32> to vector<1x128xf32>
    %139 = vector.broadcast %137 : vector<8x1xf32> to vector<8x128xf32>
    %140 = vector.broadcast %138 : vector<1x128xf32> to vector<8x128xf32>
    %141 = arith.mulf %139, %140 : vector<8x128xf32>
    %142 = arith.addf %136, %141 : vector<8x128xf32>
    %143 = vector.extract_strided_slice %0 {offsets = [0, 11], sizes = [8, 1], strides = [1, 1]} : vector<8x24xf32> to vector<8x1xf32>
    %144 = vector.extract_strided_slice %3 {offsets = [2, 0], sizes = [1, 128], strides = [1, 1]} : vector<3x128xf32> to vector<1x128xf32>
    %145 = vector.broadcast %143 : vector<8x1xf32> to vector<8x128xf32>
    %146 = vector.broadcast %144 : vector<1x128xf32> to vector<8x128xf32>
    %147 = arith.mulf %145, %146 : vector<8x128xf32>
    %148 = arith.addf %142, %147 : vector<8x128xf32>
    %cst_13 = arith.constant dense<0.000000e+00> : vector<8x128xf32>
    %149 = tpu.matmul %129, %2, %cst_13 {dimension_numbers = #tpu.dot_dimension_numbers<[1], [0], [0], [1], [0, 0, 1, 1], [], []>} : vector<8x32xf32>, vector<32x128xf32>, vector<8x128xf32> -> vector<8x128xf32>
    %150 = arith.addf %148, %149 : vector<8x128xf32>
    %151 = vector.broadcast %13 : vector<1x128xf32> to vector<8x128xf32>
    %152 = arith.mulf %150, %151 : vector<8x128xf32>
    %153 = math.tanh %152 : vector<8x128xf32>
    %154 = vector.broadcast %13 : vector<1x128xf32> to vector<8x128xf32>
    %155 = arith.mulf %153, %154 : vector<8x128xf32>
    %156 = vector.broadcast %16 : vector<1x128xf32> to vector<8x128xf32>
    %157 = arith.addf %155, %156 : vector<8x128xf32>
    %158 = vector.extract_strided_slice %157 {offsets = [0, 0], sizes = [8, 32], strides = [1, 1]} : vector<8x128xf32> to vector<8x32xf32>
    %159 = vector.extract_strided_slice %157 {offsets = [0, 32], sizes = [8, 32], strides = [1, 1]} : vector<8x128xf32> to vector<8x32xf32>
    %160 = vector.extract_strided_slice %157 {offsets = [0, 64], sizes = [8, 32], strides = [1, 1]} : vector<8x128xf32> to vector<8x32xf32>
    %161 = vector.extract_strided_slice %157 {offsets = [0, 96], sizes = [8, 32], strides = [1, 1]} : vector<8x128xf32> to vector<8x32xf32>
    %162 = arith.mulf %159, %127 : vector<8x32xf32>
    %163 = arith.mulf %158, %160 : vector<8x32xf32>
    %164 = arith.addf %162, %163 : vector<8x32xf32>
    %165 = math.tanh %164 : vector<8x32xf32>
    %166 = arith.mulf %161, %165 : vector<8x32xf32>
    %167 = vector.extract_strided_slice %0 {offsets = [0, 12], sizes = [8, 1], strides = [1, 1]} : vector<8x24xf32> to vector<8x1xf32>
    %168 = vector.extract_strided_slice %3 {offsets = [0, 0], sizes = [1, 128], strides = [1, 1]} : vector<3x128xf32> to vector<1x128xf32>
    %169 = vector.broadcast %167 : vector<8x1xf32> to vector<8x128xf32>
    %170 = vector.broadcast %168 : vector<1x128xf32> to vector<8x128xf32>
    %171 = arith.mulf %169, %170 : vector<8x128xf32>
    %172 = vector.broadcast %4 : vector<1x128xf32> to vector<8x128xf32>
    %173 = arith.addf %172, %171 : vector<8x128xf32>
    %174 = vector.extract_strided_slice %0 {offsets = [0, 13], sizes = [8, 1], strides = [1, 1]} : vector<8x24xf32> to vector<8x1xf32>
    %175 = vector.extract_strided_slice %3 {offsets = [1, 0], sizes = [1, 128], strides = [1, 1]} : vector<3x128xf32> to vector<1x128xf32>
    %176 = vector.broadcast %174 : vector<8x1xf32> to vector<8x128xf32>
    %177 = vector.broadcast %175 : vector<1x128xf32> to vector<8x128xf32>
    %178 = arith.mulf %176, %177 : vector<8x128xf32>
    %179 = arith.addf %173, %178 : vector<8x128xf32>
    %180 = vector.extract_strided_slice %0 {offsets = [0, 14], sizes = [8, 1], strides = [1, 1]} : vector<8x24xf32> to vector<8x1xf32>
    %181 = vector.extract_strided_slice %3 {offsets = [2, 0], sizes = [1, 128], strides = [1, 1]} : vector<3x128xf32> to vector<1x128xf32>
    %182 = vector.broadcast %180 : vector<8x1xf32> to vector<8x128xf32>
    %183 = vector.broadcast %181 : vector<1x128xf32> to vector<8x128xf32>
    %184 = arith.mulf %182, %183 : vector<8x128xf32>
    %185 = arith.addf %179, %184 : vector<8x128xf32>
    %cst_14 = arith.constant dense<0.000000e+00> : vector<8x128xf32>
    %186 = tpu.matmul %166, %2, %cst_14 {dimension_numbers = #tpu.dot_dimension_numbers<[1], [0], [0], [1], [0, 0, 1, 1], [], []>} : vector<8x32xf32>, vector<32x128xf32>, vector<8x128xf32> -> vector<8x128xf32>
    %187 = arith.addf %185, %186 : vector<8x128xf32>
    %188 = vector.broadcast %13 : vector<1x128xf32> to vector<8x128xf32>
    %189 = arith.mulf %187, %188 : vector<8x128xf32>
    %190 = math.tanh %189 : vector<8x128xf32>
    %191 = vector.broadcast %13 : vector<1x128xf32> to vector<8x128xf32>
    %192 = arith.mulf %190, %191 : vector<8x128xf32>
    %193 = vector.broadcast %16 : vector<1x128xf32> to vector<8x128xf32>
    %194 = arith.addf %192, %193 : vector<8x128xf32>
    %195 = vector.extract_strided_slice %194 {offsets = [0, 0], sizes = [8, 32], strides = [1, 1]} : vector<8x128xf32> to vector<8x32xf32>
    %196 = vector.extract_strided_slice %194 {offsets = [0, 32], sizes = [8, 32], strides = [1, 1]} : vector<8x128xf32> to vector<8x32xf32>
    %197 = vector.extract_strided_slice %194 {offsets = [0, 64], sizes = [8, 32], strides = [1, 1]} : vector<8x128xf32> to vector<8x32xf32>
    %198 = vector.extract_strided_slice %194 {offsets = [0, 96], sizes = [8, 32], strides = [1, 1]} : vector<8x128xf32> to vector<8x32xf32>
    %199 = arith.mulf %196, %164 : vector<8x32xf32>
    %200 = arith.mulf %195, %197 : vector<8x32xf32>
    %201 = arith.addf %199, %200 : vector<8x32xf32>
    %202 = math.tanh %201 : vector<8x32xf32>
    %203 = arith.mulf %198, %202 : vector<8x32xf32>
    %204 = vector.extract_strided_slice %0 {offsets = [0, 15], sizes = [8, 1], strides = [1, 1]} : vector<8x24xf32> to vector<8x1xf32>
    %205 = vector.extract_strided_slice %3 {offsets = [0, 0], sizes = [1, 128], strides = [1, 1]} : vector<3x128xf32> to vector<1x128xf32>
    %206 = vector.broadcast %204 : vector<8x1xf32> to vector<8x128xf32>
    %207 = vector.broadcast %205 : vector<1x128xf32> to vector<8x128xf32>
    %208 = arith.mulf %206, %207 : vector<8x128xf32>
    %209 = vector.broadcast %4 : vector<1x128xf32> to vector<8x128xf32>
    %210 = arith.addf %209, %208 : vector<8x128xf32>
    %211 = vector.extract_strided_slice %0 {offsets = [0, 16], sizes = [8, 1], strides = [1, 1]} : vector<8x24xf32> to vector<8x1xf32>
    %212 = vector.extract_strided_slice %3 {offsets = [1, 0], sizes = [1, 128], strides = [1, 1]} : vector<3x128xf32> to vector<1x128xf32>
    %213 = vector.broadcast %211 : vector<8x1xf32> to vector<8x128xf32>
    %214 = vector.broadcast %212 : vector<1x128xf32> to vector<8x128xf32>
    %215 = arith.mulf %213, %214 : vector<8x128xf32>
    %216 = arith.addf %210, %215 : vector<8x128xf32>
    %217 = vector.extract_strided_slice %0 {offsets = [0, 17], sizes = [8, 1], strides = [1, 1]} : vector<8x24xf32> to vector<8x1xf32>
    %218 = vector.extract_strided_slice %3 {offsets = [2, 0], sizes = [1, 128], strides = [1, 1]} : vector<3x128xf32> to vector<1x128xf32>
    %219 = vector.broadcast %217 : vector<8x1xf32> to vector<8x128xf32>
    %220 = vector.broadcast %218 : vector<1x128xf32> to vector<8x128xf32>
    %221 = arith.mulf %219, %220 : vector<8x128xf32>
    %222 = arith.addf %216, %221 : vector<8x128xf32>
    %cst_15 = arith.constant dense<0.000000e+00> : vector<8x128xf32>
    %223 = tpu.matmul %203, %2, %cst_15 {dimension_numbers = #tpu.dot_dimension_numbers<[1], [0], [0], [1], [0, 0, 1, 1], [], []>} : vector<8x32xf32>, vector<32x128xf32>, vector<8x128xf32> -> vector<8x128xf32>
    %224 = arith.addf %222, %223 : vector<8x128xf32>
    %225 = vector.broadcast %13 : vector<1x128xf32> to vector<8x128xf32>
    %226 = arith.mulf %224, %225 : vector<8x128xf32>
    %227 = math.tanh %226 : vector<8x128xf32>
    %228 = vector.broadcast %13 : vector<1x128xf32> to vector<8x128xf32>
    %229 = arith.mulf %227, %228 : vector<8x128xf32>
    %230 = vector.broadcast %16 : vector<1x128xf32> to vector<8x128xf32>
    %231 = arith.addf %229, %230 : vector<8x128xf32>
    %232 = vector.extract_strided_slice %231 {offsets = [0, 0], sizes = [8, 32], strides = [1, 1]} : vector<8x128xf32> to vector<8x32xf32>
    %233 = vector.extract_strided_slice %231 {offsets = [0, 32], sizes = [8, 32], strides = [1, 1]} : vector<8x128xf32> to vector<8x32xf32>
    %234 = vector.extract_strided_slice %231 {offsets = [0, 64], sizes = [8, 32], strides = [1, 1]} : vector<8x128xf32> to vector<8x32xf32>
    %235 = vector.extract_strided_slice %231 {offsets = [0, 96], sizes = [8, 32], strides = [1, 1]} : vector<8x128xf32> to vector<8x32xf32>
    %236 = arith.mulf %233, %201 : vector<8x32xf32>
    %237 = arith.mulf %232, %234 : vector<8x32xf32>
    %238 = arith.addf %236, %237 : vector<8x32xf32>
    %239 = math.tanh %238 : vector<8x32xf32>
    %240 = arith.mulf %235, %239 : vector<8x32xf32>
    %241 = vector.extract_strided_slice %0 {offsets = [0, 18], sizes = [8, 1], strides = [1, 1]} : vector<8x24xf32> to vector<8x1xf32>
    %242 = vector.extract_strided_slice %3 {offsets = [0, 0], sizes = [1, 128], strides = [1, 1]} : vector<3x128xf32> to vector<1x128xf32>
    %243 = vector.broadcast %241 : vector<8x1xf32> to vector<8x128xf32>
    %244 = vector.broadcast %242 : vector<1x128xf32> to vector<8x128xf32>
    %245 = arith.mulf %243, %244 : vector<8x128xf32>
    %246 = vector.broadcast %4 : vector<1x128xf32> to vector<8x128xf32>
    %247 = arith.addf %246, %245 : vector<8x128xf32>
    %248 = vector.extract_strided_slice %0 {offsets = [0, 19], sizes = [8, 1], strides = [1, 1]} : vector<8x24xf32> to vector<8x1xf32>
    %249 = vector.extract_strided_slice %3 {offsets = [1, 0], sizes = [1, 128], strides = [1, 1]} : vector<3x128xf32> to vector<1x128xf32>
    %250 = vector.broadcast %248 : vector<8x1xf32> to vector<8x128xf32>
    %251 = vector.broadcast %249 : vector<1x128xf32> to vector<8x128xf32>
    %252 = arith.mulf %250, %251 : vector<8x128xf32>
    %253 = arith.addf %247, %252 : vector<8x128xf32>
    %254 = vector.extract_strided_slice %0 {offsets = [0, 20], sizes = [8, 1], strides = [1, 1]} : vector<8x24xf32> to vector<8x1xf32>
    %255 = vector.extract_strided_slice %3 {offsets = [2, 0], sizes = [1, 128], strides = [1, 1]} : vector<3x128xf32> to vector<1x128xf32>
    %256 = vector.broadcast %254 : vector<8x1xf32> to vector<8x128xf32>
    %257 = vector.broadcast %255 : vector<1x128xf32> to vector<8x128xf32>
    %258 = arith.mulf %256, %257 : vector<8x128xf32>
    %259 = arith.addf %253, %258 : vector<8x128xf32>
    %cst_16 = arith.constant dense<0.000000e+00> : vector<8x128xf32>
    %260 = tpu.matmul %240, %2, %cst_16 {dimension_numbers = #tpu.dot_dimension_numbers<[1], [0], [0], [1], [0, 0, 1, 1], [], []>} : vector<8x32xf32>, vector<32x128xf32>, vector<8x128xf32> -> vector<8x128xf32>
    %261 = arith.addf %259, %260 : vector<8x128xf32>
    %262 = vector.broadcast %13 : vector<1x128xf32> to vector<8x128xf32>
    %263 = arith.mulf %261, %262 : vector<8x128xf32>
    %264 = math.tanh %263 : vector<8x128xf32>
    %265 = vector.broadcast %13 : vector<1x128xf32> to vector<8x128xf32>
    %266 = arith.mulf %264, %265 : vector<8x128xf32>
    %267 = vector.broadcast %16 : vector<1x128xf32> to vector<8x128xf32>
    %268 = arith.addf %266, %267 : vector<8x128xf32>
    %269 = vector.extract_strided_slice %268 {offsets = [0, 0], sizes = [8, 32], strides = [1, 1]} : vector<8x128xf32> to vector<8x32xf32>
    %270 = vector.extract_strided_slice %268 {offsets = [0, 32], sizes = [8, 32], strides = [1, 1]} : vector<8x128xf32> to vector<8x32xf32>
    %271 = vector.extract_strided_slice %268 {offsets = [0, 64], sizes = [8, 32], strides = [1, 1]} : vector<8x128xf32> to vector<8x32xf32>
    %272 = vector.extract_strided_slice %268 {offsets = [0, 96], sizes = [8, 32], strides = [1, 1]} : vector<8x128xf32> to vector<8x32xf32>
    %273 = arith.mulf %270, %238 : vector<8x32xf32>
    %274 = arith.mulf %269, %271 : vector<8x32xf32>
    %275 = arith.addf %273, %274 : vector<8x32xf32>
    %276 = math.tanh %275 : vector<8x32xf32>
    %277 = arith.mulf %272, %276 : vector<8x32xf32>
    %278 = vector.extract_strided_slice %0 {offsets = [0, 21], sizes = [8, 1], strides = [1, 1]} : vector<8x24xf32> to vector<8x1xf32>
    %279 = vector.extract_strided_slice %3 {offsets = [0, 0], sizes = [1, 128], strides = [1, 1]} : vector<3x128xf32> to vector<1x128xf32>
    %280 = vector.broadcast %278 : vector<8x1xf32> to vector<8x128xf32>
    %281 = vector.broadcast %279 : vector<1x128xf32> to vector<8x128xf32>
    %282 = arith.mulf %280, %281 : vector<8x128xf32>
    %283 = vector.broadcast %4 : vector<1x128xf32> to vector<8x128xf32>
    %284 = arith.addf %283, %282 : vector<8x128xf32>
    %285 = vector.extract_strided_slice %0 {offsets = [0, 22], sizes = [8, 1], strides = [1, 1]} : vector<8x24xf32> to vector<8x1xf32>
    %286 = vector.extract_strided_slice %3 {offsets = [1, 0], sizes = [1, 128], strides = [1, 1]} : vector<3x128xf32> to vector<1x128xf32>
    %287 = vector.broadcast %285 : vector<8x1xf32> to vector<8x128xf32>
    %288 = vector.broadcast %286 : vector<1x128xf32> to vector<8x128xf32>
    %289 = arith.mulf %287, %288 : vector<8x128xf32>
    %290 = arith.addf %284, %289 : vector<8x128xf32>
    %291 = vector.extract_strided_slice %0 {offsets = [0, 23], sizes = [8, 1], strides = [1, 1]} : vector<8x24xf32> to vector<8x1xf32>
    %292 = vector.extract_strided_slice %3 {offsets = [2, 0], sizes = [1, 128], strides = [1, 1]} : vector<3x128xf32> to vector<1x128xf32>
    %293 = vector.broadcast %291 : vector<8x1xf32> to vector<8x128xf32>
    %294 = vector.broadcast %292 : vector<1x128xf32> to vector<8x128xf32>
    %295 = arith.mulf %293, %294 : vector<8x128xf32>
    %296 = arith.addf %290, %295 : vector<8x128xf32>
    %cst_17 = arith.constant dense<0.000000e+00> : vector<8x128xf32>
    %297 = tpu.matmul %277, %2, %cst_17 {dimension_numbers = #tpu.dot_dimension_numbers<[1], [0], [0], [1], [0, 0, 1, 1], [], []>} : vector<8x32xf32>, vector<32x128xf32>, vector<8x128xf32> -> vector<8x128xf32>
    %298 = arith.addf %296, %297 : vector<8x128xf32>
    %299 = vector.broadcast %13 : vector<1x128xf32> to vector<8x128xf32>
    %300 = arith.mulf %298, %299 : vector<8x128xf32>
    %301 = math.tanh %300 : vector<8x128xf32>
    %302 = vector.broadcast %13 : vector<1x128xf32> to vector<8x128xf32>
    %303 = arith.mulf %301, %302 : vector<8x128xf32>
    %304 = vector.broadcast %16 : vector<1x128xf32> to vector<8x128xf32>
    %305 = arith.addf %303, %304 : vector<8x128xf32>
    %306 = vector.extract_strided_slice %305 {offsets = [0, 0], sizes = [8, 32], strides = [1, 1]} : vector<8x128xf32> to vector<8x32xf32>
    %307 = vector.extract_strided_slice %305 {offsets = [0, 32], sizes = [8, 32], strides = [1, 1]} : vector<8x128xf32> to vector<8x32xf32>
    %308 = vector.extract_strided_slice %305 {offsets = [0, 64], sizes = [8, 32], strides = [1, 1]} : vector<8x128xf32> to vector<8x32xf32>
    %309 = vector.extract_strided_slice %305 {offsets = [0, 96], sizes = [8, 32], strides = [1, 1]} : vector<8x128xf32> to vector<8x32xf32>
    %310 = arith.mulf %307, %275 : vector<8x32xf32>
    %311 = arith.mulf %306, %308 : vector<8x32xf32>
    %312 = arith.addf %310, %311 : vector<8x32xf32>
    %313 = math.tanh %312 : vector<8x32xf32>
    %314 = arith.mulf %309, %313 : vector<8x32xf32>
    %c0_18 = arith.constant 0 : index
    %c0_19 = arith.constant 0 : index
    %315 = vector.load %arg4[%c0_18, %c0_19] : memref<35x24xf32, #tpu.memory_space<vmem>>, vector<35x24xf32>
    %316 = vector.extract_strided_slice %315 {offsets = [0, 0], sizes = [32, 24], strides = [1, 1]} : vector<35x24xf32> to vector<32x24xf32>
    %317 = vector.extract_strided_slice %315 {offsets = [32, 0], sizes = [1, 24], strides = [1, 1]} : vector<35x24xf32> to vector<1x24xf32>
    %318 = vector.extract_strided_slice %315 {offsets = [33, 0], sizes = [1, 24], strides = [1, 1]} : vector<35x24xf32> to vector<1x24xf32>
    %319 = vector.extract_strided_slice %315 {offsets = [34, 0], sizes = [1, 1], strides = [1, 1]} : vector<35x24xf32> to vector<1x1xf32>
    %cst_20 = arith.constant dense<0.000000e+00> : vector<8x24xf32>
    %320 = tpu.matmul %314, %316, %cst_20 {dimension_numbers = #tpu.dot_dimension_numbers<[1], [0], [0], [1], [0, 0, 1, 1], [], []>} : vector<8x32xf32>, vector<32x24xf32>, vector<8x24xf32> -> vector<8x24xf32>
    %321 = vector.broadcast %317 : vector<1x24xf32> to vector<8x24xf32>
    %322 = arith.addf %320, %321 : vector<8x24xf32>
    %cst_21 = arith.constant 0.000000e+00 : f32
    %323 = vector.broadcast %cst_21 : f32 to vector<8x24xf32>
    %324 = arith.maximumf %322, %323 : vector<8x24xf32>
    %325 = vector.broadcast %318 : vector<1x24xf32> to vector<8x24xf32>
    %326 = arith.mulf %324, %325 : vector<8x24xf32>
    %cst_22 = arith.constant dense<0.000000e+00> : vector<8xf32>
    %327 = vector.multi_reduction <add>, %326, %cst_22 [1] : vector<8x24xf32> to vector<8xf32>
    %328 = vector.shape_cast %327 : vector<8xf32> to vector<8x1xf32>
    %329 = vector.broadcast %319 : vector<1x1xf32> to vector<8x1xf32>
    %330 = arith.addf %328, %329 : vector<8x1xf32>
    %331 = math.tanh %330 : vector<8x1xf32>
    %c0_23 = arith.constant 0 : index
    %c0_24 = arith.constant 0 : index
    %332 = vector.load %arg5[%c0_23, %c0_24] : memref<8x1xf32, #tpu.memory_space<vmem>>, vector<8x1xf32>
    tpu.vector_store %arg5[%c0_23, %c0_24], %331 {strides = array<i32>} : memref<8x1xf32, #tpu.memory_space<vmem>>, vector<8x1xf32>,
    return
  }
}

</mosaic_0001>

<llo_original>
// kernel: notestart_forward.1
$region0: #{notestart_forward.1}
  #allocation0 [shape = 'u32[]', space=smem, size = 0x4, offset = 0x4, fixed_abs, tag = 'smem constant byte address 0x4 - core index']
  #allocation1 [shape = 'u32[144,128]{1,0:T(1,128)}', space=vmem, size = 0x12000, scoped, tag = 'internal scratch']
  %s0 = inlined_call_operand.vmem [shape: f32[8,24], index: 0, kind: input, shape index: {}]
  %s1 = inlined_call_operand.vmem [shape: f32[8,32], index: 1, kind: input, shape index: {}]
  %s2 = inlined_call_operand.vmem [shape: f32[8,32], index: 2, kind: input, shape index: {}]
  %s3 = inlined_call_operand.vmem [shape: f32[36,128], index: 3, kind: input, shape index: {}]
  %s4 = inlined_call_operand.vmem [shape: f32[35,24], index: 4, kind: input, shape index: {}]
  %s5 = inlined_call_operand.vmem [shape: f32[8,1], index: 5, kind: output, shape index: {}]
  %s6 = sld [smem:[#allocation0]]
  $region30: #{notestart_forward.1} parent=0
    _
  %s8 = ssub.s32 1, %s6
  %s9 = scalar_select 0, %s8, %s6
  // Predicated region
  $region2: #{notestart_forward.1} parent=0 // pred_check
    _
  $region3: #{notestart_forward.1} parent=0 // pred_check_branch
    %11 = sbr.rel (0) target = $region5
  $region4: #{notestart_forward.1} parent=0 // pred_region
    _
  $region5: #{notestart_forward.1} parent=0 // pred_fallthru
    _
  // Predicated region
  $region6: #{notestart_forward.1} parent=0 // pred_check
    _
  $region7: #{notestart_forward.1} parent=0 // pred_check_branch
    %13 = sbr.rel (0) target = $region9
  $region8: #{notestart_forward.1} parent=0 // pred_region
    _
  $region9: #{notestart_forward.1} parent=0 // pred_fallthru
    _
  // Predicated region
  $region10: #{notestart_forward.1} parent=0 // pred_check
    _
  $region11: #{notestart_forward.1} parent=0 // pred_check_branch
    %15 = sbr.rel (0) target = $region13
  $region12: #{notestart_forward.1} parent=0 // pred_region
    _
  $region13: #{notestart_forward.1} parent=0 // pred_fallthru
    _
  // Predicated region
  $region14: #{notestart_forward.1} parent=0 // pred_check
    _
  $region15: #{notestart_forward.1} parent=0 // pred_check_branch
    %17 = sbr.rel (0) target = $region17
  $region16: #{notestart_forward.1} parent=0 // pred_region
    _
  $region17: #{notestart_forward.1} parent=0 // pred_fallthru
    _
  // Predicated region
  $region18: #{notestart_forward.1} parent=0 // pred_check
    _
  $region19: #{notestart_forward.1} parent=0 // pred_check_branch
    %19 = sbr.rel (0) target = $region21
  $region20: #{notestart_forward.1} parent=0 // pred_region
    _
  $region21: #{notestart_forward.1} parent=0 // pred_fallthru
    _
  %v20 = vld [vmem:[%s0] sm:$0xff]
  %v21 = vld [vmem:[%s3] sm:$0xff]
  %v22 = vld [vmem:[%s3 + $0x8] sm:$0xff]
  %v23 = vld [vmem:[%s3 + $0x10] sm:$0xff]
  %v24 = vld [vmem:[%s3 + $0x18] sm:$0xff]
  %v25 = vld [vmem:[%s3 + $0x20] sm:$0xf]
  %v26 = vlaneseq
  %v27 = vand.u32 %v26, 127
  %vm28 = vcmp.ge.s32.totalorder %v27, 64
  %vm29 = vcmp.lt.s32.totalorder %v27, 96
  %vm30 = vmand %vm28, %vm29
  %v31 = vsel %vm30, 1.0, 0.5
  %v32 = vsel %vm30, 0.0, 0.5
  %v33 = vld [vmem:[%s1] sm:$0xff]
  %v34 = vld [vmem:[%s2] sm:$0xff]
  %36 = vset.pattern.permute.xlu0 0
  %37 = vperm.xlu0 %36, %v20
  %v38 = vpop.permute.xlu0 %37
  %v40 = vlaneseq
  %v41 = vshrl.u32 %v40, 7
  %v42 = vsub.s32 0, %v41
  %v43 = vrot.slane %v25, %v42
  %v44 = vmul.f32 %v38, %v43
  %v45 = vlaneseq
  %v46 = vshrl.u32 %v45, 7
  %v47 = vsub.s32 3, %v46
  %v48 = vrot.slane %v25, %v47
  %v49 = vadd.f32 %v48, %v44
  %50 = vset.pattern.permute.xlu0 1
  %51 = vperm.xlu0 %50, %v20
  %v52 = vpop.permute.xlu0 %51
  %v54 = vlaneseq
  %v55 = vshrl.u32 %v54, 7
  %v56 = vsub.s32 1, %v55
  %v57 = vrot.slane %v25, %v56
  %v58 = vmul.f32 %v52, %v57
  %v59 = vadd.f32 %v49, %v58
  %60 = vset.pattern.permute.xlu0 2
  %61 = vperm.xlu0 %60, %v20
  %v62 = vpop.permute.xlu0 %61
  %v64 = vlaneseq
  %v65 = vshrl.u32 %v64, 7
  %v66 = vsub.s32 2, %v65
  %v67 = vrot.slane %v25, %v66
  %v68 = vmul.f32 %v62, %v67
  %v69 = vadd.f32 %v59, %v68
  %vm70 = vcmask 261120
  %v72 = vsel %vm70, %v33, 0
  %74 = vmatprep.subr.mxu0 0.0
  %75 = vmatpush1.msra.mxu0 %v21
  %76 = vmatprep.subr.mxu0 0.0
  %77 = vmatpush1.msra.mxu0 %v22
  %78 = vmatprep.subr.mxu0 0.0
  %79 = vmatpush1.msra.mxu0 %v23
  %80 = vmatprep.subr.mxu0 0.0
  %81 = vmatpush1.msra.mxu0 %v24
  %82 = vmatprep.subr.mxu0 0.0
  %83 = vmatpush1.msra.mxu0 0.0
  %84 = vmatprep.subr.mxu0 0.0
  %85 = vmatpush1.msra.mxu0 0.0
  %86 = vmatprep.subr.mxu0 0.0
  %87 = vmatpush1.msra.mxu0 0.0
  %88 = vmatprep.subr.mxu0 0.0
  %89 = vmatpush1.msra.mxu0 0.0
  %90 = vmatprep.subr.mxu0 0.0
  %91 = vmatpush1.msra.mxu0 0.0
  %92 = vmatprep.subr.mxu0 0.0
  %93 = vmatpush1.msra.mxu0 0.0
  %94 = vmatprep.subr.mxu0 0.0
  %95 = vmatpush1.msra.mxu0 0.0
  %96 = vmatprep.subr.mxu0 0.0
  %97 = vmatpush1.msra.mxu0 0.0
  %98 = vmatprep.subr.mxu0 0.0
  %99 = vmatpush1.msra.mxu0 0.0
  %100 = vmatprep.subr.mxu0 0.0
  %101 = vmatpush1.msra.mxu0 0.0
  %102 = vmatprep.subr.mxu0 0.0
  %103 = vmatpush1.msra.mxu0 0.0
  %104 = vmatprep.subr.mxu0 0.0
  %105 = vmatpush1.msra.mxu0 0.0
  %106 = vmatprep.subr.mxu0 0.0
  %107 = vmatpush1.msra.mxu0 0.0
  %108 = vmatprep.subr.mxu0 0.0
  %109 = vmatpush1.msra.mxu0 0.0
  %110 = vmatprep.subr.mxu0 0.0
  %111 = vmatpush1.msra.mxu0 0.0
  %112 = vmatprep.subr.mxu0 0.0
  %113 = vmatpush1.msra.mxu0 0.0
  %114 = vmatprep.subr.mxu0 0.0
  %115 = vmatpush1.msra.mxu0 0.0
  %116 = vmatprep.subr.mxu0 0.0
  %117 = vmatpush1.msra.mxu0 0.0
  %118 = vmatprep.subr.mxu0 0.0
  %119 = vmatpush1.msra.mxu0 0.0
  %120 = vmatprep.subr.mxu0 0.0
  %121 = vmatpush1.msra.mxu0 0.0
  %122 = vmatprep.subr.mxu0 0.0
  %123 = vmatpush1.msra.mxu0 0.0
  %124 = vmatprep.subr.mxu0 0.0
  %125 = vmatpush1.msra.mxu0 0.0
  %126 = vmatprep.subr.mxu0 0.0
  %127 = vmatpush1.msra.mxu0 0.0
  %128 = vmatprep.subr.mxu0 0.0
  %129 = vmatpush1.msra.mxu0 0.0
  %130 = vmatprep.subr.mxu0 0.0
  %131 = vmatpush1.msra.mxu0 0.0
  %132 = vmatprep.subr.mxu0 0.0
  %133 = vmatpush1.msra.mxu0 0.0
  %134 = vmatprep.subr.mxu0 0.0
  %135 = vmatpush1.msra.mxu0 0.0
  %136 = vmatprep.subr.mxu0 0.0
  %137 = vmatpush1.msra.mxu0 0.0
  %138 = vmatprep.mubr.f32.mxu0 0.0
  %139 = vmatmul.mubr.f32.gmra.mrb[0].mxu0 %v72
  %v140 = vpop.f32.mrb[0].mxu0
  %v141 = vadd.f32 0.0, %v140
  %v142 = vpop.f32.mrb[0].mxu0
  %143 = vdwg.mxu0
  %v144 = vadd.f32 %v69, %v141
  %v145 = vmul.f32 %v144, %v31
  %v146 = vtanh.pop %v145
  %v147 = vmul.f32 %v146, %v31
  %v148 = vadd.f32 %v147, %v32
  %150 = vrot.lane.b32.xlu0 %v34, 32
  %v151 = vpop.permute.xlu0 %150
  %v153 = vmul.f32 %v148, %v151
  %155 = vrot.lane.b32.xlu0 %v148, 64
  %v156 = vpop.permute.xlu0 %155
  %v158 = vmul.f32 %v148, %v156
  %160 = vrot.lane.b32.xlu0 %v158, 32
  %v161 = vpop.permute.xlu0 %160
  %v163 = vadd.f32 %v153, %v161
  %v164 = vtanh.pop %v163
  %166 = vrot.lane.b32.xlu0 %v164, 64
  %v167 = vpop.permute.xlu0 %166
  %v169 = vmul.f32 %v148, %v167
  %170 = vset.pattern.permute.xlu0 3
  %171 = vperm.xlu0 %170, %v20
  %v172 = vpop.permute.xlu0 %171
  %v174 = vmul.f32 %v172, %v43
  %v175 = vadd.f32 %v48, %v174
  %176 = vset.pattern.permute.xlu0 4
  %177 = vperm.xlu0 %176, %v20
  %v178 = vpop.permute.xlu0 %177
  %v180 = vmul.f32 %v178, %v57
  %v181 = vadd.f32 %v175, %v180
  %182 = vset.pattern.permute.xlu0 5
  %183 = vperm.xlu0 %182, %v20
  %v184 = vpop.permute.xlu0 %183
  %v186 = vmul.f32 %v184, %v67
  %v187 = vadd.f32 %v181, %v186
  %189 = vrot.lane.b32.xlu0 %v169, 32
  %v190 = vpop.permute.xlu0 %189
  %v191 = vsel %vm70, %v190, 0
  %193 = vmatprep.subr.mxu0 0.0
  %194 = vmatpush1.msra.mxu0 %v21
  %195 = vmatprep.subr.mxu0 0.0
  %196 = vmatpush1.msra.mxu0 %v22
  %197 = vmatprep.subr.mxu0 0.0
  %198 = vmatpush1.msra.mxu0 %v23
  %199 = vmatprep.subr.mxu0 0.0
  %200 = vmatpush1.msra.mxu0 %v24
  %201 = vmatprep.subr.mxu0 0.0
  %202 = vmatpush1.msra.mxu0 0.0
  %203 = vmatprep.subr.mxu0 0.0
  %204 = vmatpush1.msra.mxu0 0.0
  %205 = vmatprep.subr.mxu0 0.0
  %206 = vmatpush1.msra.mxu0 0.0
  %207 = vmatprep.subr.mxu0 0.0
  %208 = vmatpush1.msra.mxu0 0.0
  %209 = vmatprep.subr.mxu0 0.0
  %210 = vmatpush1.msra.mxu0 0.0
  %211 = vmatprep.subr.mxu0 0.0
  %212 = vmatpush1.msra.mxu0 0.0
  %213 = vmatprep.subr.mxu0 0.0
  %214 = vmatpush1.msra.mxu0 0.0
  %215 = vmatprep.subr.mxu0 0.0
  %216 = vmatpush1.msra.mxu0 0.0
  %217 = vmatprep.subr.mxu0 0.0
  %218 = vmatpush1.msra.mxu0 0.0
  %219 = vmatprep.subr.mxu0 0.0
  %220 = vmatpush1.msra.mxu0 0.0
  %221 = vmatprep.subr.mxu0 0.0
  %222 = vmatpush1.msra.mxu0 0.0
  %223 = vmatprep.subr.mxu0 0.0
  %224 = vmatpush1.msra.mxu0 0.0
  %225 = vmatprep.subr.mxu0 0.0
  %226 = vmatpush1.msra.mxu0 0.0
  %227 = vmatprep.subr.mxu0 0.0
  %228 = vmatpush1.msra.mxu0 0.0
  %229 = vmatprep.subr.mxu0 0.0
  %230 = vmatpush1.msra.mxu0 0.0
  %231 = vmatprep.subr.mxu0 0.0
  %232 = vmatpush1.msra.mxu0 0.0
  %233 = vmatprep.subr.mxu0 0.0
  %234 = vmatpush1.msra.mxu0 0.0
  %235 = vmatprep.subr.mxu0 0.0
  %236 = vmatpush1.msra.mxu0 0.0
  %237 = vmatprep.subr.mxu0 0.0
  %238 = vmatpush1.msra.mxu0 0.0
  %239 = vmatprep.subr.mxu0 0.0
  %240 = vmatpush1.msra.mxu0 0.0
  %241 = vmatprep.subr.mxu0 0.0
  %242 = vmatpush1.msra.mxu0 0.0
  %243 = vmatprep.subr.mxu0 0.0
  %244 = vmatpush1.msra.mxu0 0.0
  %245 = vmatprep.subr.mxu0 0.0
  %246 = vmatpush1.msra.mxu0 0.0
  %247 = vmatprep.subr.mxu0 0.0
  %248 = vmatpush1.msra.mxu0 0.0
  %249 = vmatprep.subr.mxu0 0.0
  %250 = vmatpush1.msra.mxu0 0.0
  %251 = vmatprep.subr.mxu0 0.0
  %252 = vmatpush1.msra.mxu0 0.0
  %253 = vmatprep.subr.mxu0 0.0
  %254 = vmatpush1.msra.mxu0 0.0
  %255 = vmatprep.subr.mxu0 0.0
  %256 = vmatpush1.msra.mxu0 0.0
  %257 = vmatprep.mubr.f32.mxu0 0.0
  %258 = vmatmul.mubr.f32.gmra.mrb[0].mxu0 %v191
  %v259 = vpop.f32.mrb[0].mxu0
  %v260 = vadd.f32 0.0, %v259
  %v261 = vpop.f32.mrb[0].mxu0
  %262 = vdwg.mxu0
  %v263 = vadd.f32 %v187, %v260
  %v264 = vmul.f32 %v263, %v31
  %v265 = vtanh.pop %v264
  %v266 = vmul.f32 %v265, %v31
  %v267 = vadd.f32 %v266, %v32
  %v268 = vmul.f32 %v267, %v163
  %270 = vrot.lane.b32.xlu0 %v267, 64
  %v271 = vpop.permute.xlu0 %270
  %v273 = vmul.f32 %v267, %v271
  %275 = vrot.lane.b32.xlu0 %v273, 32
  %v276 = vpop.permute.xlu0 %275
  %v278 = vadd.f32 %v268, %v276
  %v279 = vtanh.pop %v278
  %281 = vrot.lane.b32.xlu0 %v279, 64
  %v282 = vpop.permute.xlu0 %281
  %v284 = vmul.f32 %v267, %v282
  %285 = vset.pattern.permute.xlu0 6
  %286 = vperm.xlu0 %285, %v20
  %v287 = vpop.permute.xlu0 %286
  %v289 = vmul.f32 %v287, %v43
  %v290 = vadd.f32 %v48, %v289
  %291 = vset.pattern.permute.xlu0 7
  %292 = vperm.xlu0 %291, %v20
  %v293 = vpop.permute.xlu0 %292
  %v295 = vmul.f32 %v293, %v57
  %v296 = vadd.f32 %v290, %v295
  %297 = vset.pattern.permute.xlu0 8
  %298 = vperm.xlu0 %297, %v20
  %v299 = vpop.permute.xlu0 %298
  %v301 = vmul.f32 %v299, %v67
  %v302 = vadd.f32 %v296, %v301
  %304 = vrot.lane.b32.xlu0 %v284, 32
  %v305 = vpop.permute.xlu0 %304
  %v306 = vsel %vm70, %v305, 0
  %308 = vmatprep.subr.mxu0 0.0
  %309 = vmatpush1.msra.mxu0 %v21
  %310 = vmatprep.subr.mxu0 0.0
  %311 = vmatpush1.msra.mxu0 %v22
  %312 = vmatprep.subr.mxu0 0.0
  %313 = vmatpush1.msra.mxu0 %v23
  %314 = vmatprep.subr.mxu0 0.0
  %315 = vmatpush1.msra.mxu0 %v24
  %316 = vmatprep.subr.mxu0 0.0
  %317 = vmatpush1.msra.mxu0 0.0
  %318 = vmatprep.subr.mxu0 0.0
  %319 = vmatpush1.msra.mxu0 0.0
  %320 = vmatprep.subr.mxu0 0.0
  %321 = vmatpush1.msra.mxu0 0.0
  %322 = vmatprep.subr.mxu0 0.0
  %323 = vmatpush1.msra.mxu0 0.0
  %324 = vmatprep.subr.mxu0 0.0
  %325 = vmatpush1.msra.mxu0 0.0
  %326 = vmatprep.subr.mxu0 0.0
  %327 = vmatpush1.msra.mxu0 0.0
  %328 = vmatprep.subr.mxu0 0.0
  %329 = vmatpush1.msra.mxu0 0.0
  %330 = vmatprep.subr.mxu0 0.0
  %331 = vmatpush1.msra.mxu0 0.0
  %332 = vmatprep.subr.mxu0 0.0
  %333 = vmatpush1.msra.mxu0 0.0
  %334 = vmatprep.subr.mxu0 0.0
  %335 = vmatpush1.msra.mxu0 0.0
  %336 = vmatprep.subr.mxu0 0.0
  %337 = vmatpush1.msra.mxu0 0.0
  %338 = vmatprep.subr.mxu0 0.0
  %339 = vmatpush1.msra.mxu0 0.0
  %340 = vmatprep.subr.mxu0 0.0
  %341 = vmatpush1.msra.mxu0 0.0
  %342 = vmatprep.subr.mxu0 0.0
  %343 = vmatpush1.msra.mxu0 0.0
  %344 = vmatprep.subr.mxu0 0.0
  %345 = vmatpush1.msra.mxu0 0.0
  %346 = vmatprep.subr.mxu0 0.0
  %347 = vmatpush1.msra.mxu0 0.0
  %348 = vmatprep.subr.mxu0 0.0
  %349 = vmatpush1.msra.mxu0 0.0
  %350 = vmatprep.subr.mxu0 0.0
  %351 = vmatpush1.msra.mxu0 0.0
  %352 = vmatprep.subr.mxu0 0.0
  %353 = vmatpush1.msra.mxu0 0.0
  %354 = vmatprep.subr.mxu0 0.0
  %355 = vmatpush1.msra.mxu0 0.0
  %356 = vmatprep.subr.mxu0 0.0
  %357 = vmatpush1.msra.mxu0 0.0
  %358 = vmatprep.subr.mxu0 0.0
  %359 = vmatpush1.msra.mxu0 0.0
  %360 = vmatprep.subr.mxu0 0.0
  %361 = vmatpush1.msra.mxu0 0.0
  %362 = vmatprep.subr.mxu0 0.0
  %363 = vmatpush1.msra.mxu0 0.0
  %364 = vmatprep.subr.mxu0 0.0
  %365 = vmatpush1.msra.mxu0 0.0
  %366 = vmatprep.subr.mxu0 0.0
  %367 = vmatpush1.msra.mxu0 0.0
  %368 = vmatprep.subr.mxu0 0.0
  %369 = vmatpush1.msra.mxu0 0.0
  %370 = vmatprep.subr.mxu0 0.0
  %371 = vmatpush1.msra.mxu0 0.0
  %372 = vmatprep.mubr.f32.mxu0 0.0
  %373 = vmatmul.mubr.f32.gmra.mrb[0].mxu0 %v306
  %v374 = vpop.f32.mrb[0].mxu0
  %v375 = vadd.f32 0.0, %v374
  %v376 = vpop.f32.mrb[0].mxu0
  %377 = vdwg.mxu0
  %v378 = vadd.f32 %v302, %v375
  %v379 = vmul.f32 %v378, %v31
  %v380 = vtanh.pop %v379
  %v381 = vmul.f32 %v380, %v31
  %v382 = vadd.f32 %v381, %v32
  %v383 = vmul.f32 %v382, %v278
  %385 = vrot.lane.b32.xlu0 %v382, 64
  %v386 = vpop.permute.xlu0 %385
  %v388 = vmul.f32 %v382, %v386
  %390 = vrot.lane.b32.xlu0 %v388, 32
  %v391 = vpop.permute.xlu0 %390
  %v393 = vadd.f32 %v383, %v391
  %v394 = vtanh.pop %v393
  %396 = vrot.lane.b32.xlu0 %v394, 64
  %v397 = vpop.permute.xlu0 %396
  %v399 = vmul.f32 %v382, %v397
  %400 = vset.pattern.permute.xlu0 9
  %401 = vperm.xlu0 %400, %v20
  %v402 = vpop.permute.xlu0 %401
  %v404 = vmul.f32 %v402, %v43
  %v405 = vadd.f32 %v48, %v404
  %406 = vset.pattern.permute.xlu0 10
  %407 = vperm.xlu0 %406, %v20
  %v408 = vpop.permute.xlu0 %407
  %v410 = vmul.f32 %v408, %v57
  %v411 = vadd.f32 %v405, %v410
  %412 = vset.pattern.permute.xlu0 11
  %413 = vperm.xlu0 %412, %v20
  %v414 = vpop.permute.xlu0 %413
  %v416 = vmul.f32 %v414, %v67
  %v417 = vadd.f32 %v411, %v416
  %419 = vrot.lane.b32.xlu0 %v399, 32
  %v420 = vpop.permute.xlu0 %419
  %v421 = vsel %vm70, %v420, 0
  %423 = vmatprep.subr.mxu0 0.0
  %424 = vmatpush1.msra.mxu0 %v21
  %425 = vmatprep.subr.mxu0 0.0
  %426 = vmatpush1.msra.mxu0 %v22
  %427 = vmatprep.subr.mxu0 0.0
  %428 = vmatpush1.msra.mxu0 %v23
  %429 = vmatprep.subr.mxu0 0.0
  %430 = vmatpush1.msra.mxu0 %v24
  %431 = vmatprep.subr.mxu0 0.0
  %432 = vmatpush1.msra.mxu0 0.0
  %433 = vmatprep.subr.mxu0 0.0
  %434 = vmatpush1.msra.mxu0 0.0
  %435 = vmatprep.subr.mxu0 0.0
  %436 = vmatpush1.msra.mxu0 0.0
  %437 = vmatprep.subr.mxu0 0.0
  %438 = vmatpush1.msra.mxu0 0.0
  %439 = vmatprep.subr.mxu0 0.0
  %440 = vmatpush1.msra.mxu0 0.0
  %441 = vmatprep.subr.mxu0 0.0
  %442 = vmatpush1.msra.mxu0 0.0
  %443 = vmatprep.subr.mxu0 0.0
  %444 = vmatpush1.msra.mxu0 0.0
  %445 = vmatprep.subr.mxu0 0.0
  %446 = vmatpush1.msra.mxu0 0.0
  %447 = vmatprep.subr.mxu0 0.0
  %448 = vmatpush1.msra.mxu0 0.0
  %449 = vmatprep.subr.mxu0 0.0
  %450 = vmatpush1.msra.mxu0 0.0
  %451 = vmatprep.subr.mxu0 0.0
  %452 = vmatpush1.msra.mxu0 0.0
  %453 = vmatprep.subr.mxu0 0.0
  %454 = vmatpush1.msra.mxu0 0.0
  %455 = vmatprep.subr.mxu0 0.0
  %456 = vmatpush1.msra.mxu0 0.0
  %457 = vmatprep.subr.mxu0 0.0
  %458 = vmatpush1.msra.mxu0 0.0
  %459 = vmatprep.subr.mxu0 0.0
  %460 = vmatpush1.msra.mxu0 0.0
  %461 = vmatprep.subr.mxu0 0.0
  %462 = vmatpush1.msra.mxu0 0.0
  %463 = vmatprep.subr.mxu0 0.0
  %464 = vmatpush1.msra.mxu0 0.0
  %465 = vmatprep.subr.mxu0 0.0
  %466 = vmatpush1.msra.mxu0 0.0
  %467 = vmatprep.subr.mxu0 0.0
  %468 = vmatpush1.msra.mxu0 0.0
  %469 = vmatprep.subr.mxu0 0.0
  %470 = vmatpush1.msra.mxu0 0.0
  %471 = vmatprep.subr.mxu0 0.0
  %472 = vmatpush1.msra.mxu0 0.0
  %473 = vmatprep.subr.mxu0 0.0
  %474 = vmatpush1.msra.mxu0 0.0
  %475 = vmatprep.subr.mxu0 0.0
  %476 = vmatpush1.msra.mxu0 0.0
  %477 = vmatprep.subr.mxu0 0.0
  %478 = vmatpush1.msra.mxu0 0.0
  %479 = vmatprep.subr.mxu0 0.0
  %480 = vmatpush1.msra.mxu0 0.0
  %481 = vmatprep.subr.mxu0 0.0
  %482 = vmatpush1.msra.mxu0 0.0
  %483 = vmatprep.subr.mxu0 0.0
  %484 = vmatpush1.msra.mxu0 0.0
  %485 = vmatprep.subr.mxu0 0.0
  %486 = vmatpush1.msra.mxu0 0.0
  %487 = vmatprep.mubr.f32.mxu0 0.0
  %488 = vmatmul.mubr.f32.gmra.mrb[0].mxu0 %v421
  %v489 = vpop.f32.mrb[0].mxu0
  %v490 = vadd.f32 0.0, %v489
  %v491 = vpop.f32.mrb[0].mxu0
  %492 = vdwg.mxu0
  %v493 = vadd.f32 %v417, %v490
  %v494 = vmul.f32 %v493, %v31
  %v495 = vtanh.pop %v494
  %v496 = vmul.f32 %v495, %v31
  %v497 = vadd.f32 %v496, %v32
  %v498 = vmul.f32 %v497, %v393
  %500 = vrot.lane.b32.xlu0 %v497, 64
  %v501 = vpop.permute.xlu0 %500
  %v503 = vmul.f32 %v497, %v501
  %505 = vrot.lane.b32.xlu0 %v503, 32
  %v506 = vpop.permute.xlu0 %505
  %v508 = vadd.f32 %v498, %v506
  %v509 = vtanh.pop %v508
  %511 = vrot.lane.b32.xlu0 %v509, 64
  %v512 = vpop.permute.xlu0 %511
  %v514 = vmul.f32 %v497, %v512
  %515 = vset.pattern.permute.xlu0 12
  %516 = vperm.xlu0 %515, %v20
  %v517 = vpop.permute.xlu0 %516
  %v519 = vmul.f32 %v517, %v43
  %v520 = vadd.f32 %v48, %v519
  %521 = vset.pattern.permute.xlu0 13
  %522 = vperm.xlu0 %521, %v20
  %v523 = vpop.permute.xlu0 %522
  %v525 = vmul.f32 %v523, %v57
  %v526 = vadd.f32 %v520, %v525
  %527 = vset.pattern.permute.xlu0 14
  %528 = vperm.xlu0 %527, %v20
  %v529 = vpop.permute.xlu0 %528
  %v531 = vmul.f32 %v529, %v67
  %v532 = vadd.f32 %v526, %v531
  %534 = vrot.lane.b32.xlu0 %v514, 32
  %v535 = vpop.permute.xlu0 %534
  %v536 = vsel %vm70, %v535, 0
  %538 = vmatprep.subr.mxu0 0.0
  %539 = vmatpush1.msra.mxu0 %v21
  %540 = vmatprep.subr.mxu0 0.0
  %541 = vmatpush1.msra.mxu0 %v22
  %542 = vmatprep.subr.mxu0 0.0
  %543 = vmatpush1.msra.mxu0 %v23
  %544 = vmatprep.subr.mxu0 0.0
  %545 = vmatpush1.msra.mxu0 %v24
  %546 = vmatprep.subr.mxu0 0.0
  %547 = vmatpush1.msra.mxu0 0.0
  %548 = vmatprep.subr.mxu0 0.0
  %549 = vmatpush1.msra.mxu0 0.0
  %550 = vmatprep.subr.mxu0 0.0
  %551 = vmatpush1.msra.mxu0 0.0
  %552 = vmatprep.subr.mxu0 0.0
  %553 = vmatpush1.msra.mxu0 0.0
  %554 = vmatprep.subr.mxu0 0.0
  %555 = vmatpush1.msra.mxu0 0.0
  %556 = vmatprep.subr.mxu0 0.0
  %557 = vmatpush1.msra.mxu0 0.0
  %558 = vmatprep.subr.mxu0 0.0
  %559 = vmatpush1.msra.mxu0 0.0
  %560 = vmatprep.subr.mxu0 0.0
  %561 = vmatpush1.msra.mxu0 0.0
  %562 = vmatprep.subr.mxu0 0.0
  %563 = vmatpush1.msra.mxu0 0.0
  %564 = vmatprep.subr.mxu0 0.0
  %565 = vmatpush1.msra.mxu0 0.0
  %566 = vmatprep.subr.mxu0 0.0
  %567 = vmatpush1.msra.mxu0 0.0
  %568 = vmatprep.subr.mxu0 0.0
  %569 = vmatpush1.msra.mxu0 0.0
  %570 = vmatprep.subr.mxu0 0.0
  %571 = vmatpush1.msra.mxu0 0.0
  %572 = vmatprep.subr.mxu0 0.0
  %573 = vmatpush1.msra.mxu0 0.0
  %574 = vmatprep.subr.mxu0 0.0
  %575 = vmatpush1.msra.mxu0 0.0
  %576 = vmatprep.subr.mxu0 0.0
  %577 = vmatpush1.msra.mxu0 0.0
  %578 = vmatprep.subr.mxu0 0.0
  %579 = vmatpush1.msra.mxu0 0.0
  %580 = vmatprep.subr.mxu0 0.0
  %581 = vmatpush1.msra.mxu0 0.0
  %582 = vmatprep.subr.mxu0 0.0
  %583 = vmatpush1.msra.mxu0 0.0
  %584 = vmatprep.subr.mxu0 0.0
  %585 = vmatpush1.msra.mxu0 0.0
  %586 = vmatprep.subr.mxu0 0.0
  %587 = vmatpush1.msra.mxu0 0.0
  %588 = vmatprep.subr.mxu0 0.0
  %589 = vmatpush1.msra.mxu0 0.0
  %590 = vmatprep.subr.mxu0 0.0
  %591 = vmatpush1.msra.mxu0 0.0
  %592 = vmatprep.subr.mxu0 0.0
  %593 = vmatpush1.msra.mxu0 0.0
  %594 = vmatprep.subr.mxu0 0.0
  %595 = vmatpush1.msra.mxu0 0.0
  %596 = vmatprep.subr.mxu0 0.0
  %597 = vmatpush1.msra.mxu0 0.0
  %598 = vmatprep.subr.mxu0 0.0
  %599 = vmatpush1.msra.mxu0 0.0
  %600 = vmatprep.subr.mxu0 0.0
  %601 = vmatpush1.msra.mxu0 0.0
  %602 = vmatprep.mubr.f32.mxu0 0.0
  %603 = vmatmul.mubr.f32.gmra.mrb[0].mxu0 %v536
  %v604 = vpop.f32.mrb[0].mxu0
  %v605 = vadd.f32 0.0, %v604
  %v606 = vpop.f32.mrb[0].mxu0
  %607 = vdwg.mxu0
  %v608 = vadd.f32 %v532, %v605
  %v609 = vmul.f32 %v608, %v31
  %v610 = vtanh.pop %v609
  %v611 = vmul.f32 %v610, %v31
  %v612 = vadd.f32 %v611, %v32
  %v613 = vmul.f32 %v612, %v508
  %615 = vrot.lane.b32.xlu0 %v612, 64
  %v616 = vpop.permute.xlu0 %615
  %v618 = vmul.f32 %v612, %v616
  %620 = vrot.lane.b32.xlu0 %v618, 32
  %v621 = vpop.permute.xlu0 %620
  %v623 = vadd.f32 %v613, %v621
  %v624 = vtanh.pop %v623
  %626 = vrot.lane.b32.xlu0 %v624, 64
  %v627 = vpop.permute.xlu0 %626
  %v629 = vmul.f32 %v612, %v627
  %630 = vset.pattern.permute.xlu0 15
  %631 = vperm.xlu0 %630, %v20
  %v632 = vpop.permute.xlu0 %631
  %v634 = vmul.f32 %v632, %v43
  %v635 = vadd.f32 %v48, %v634
  %636 = vset.pattern.permute.xlu0 16
  %637 = vperm.xlu0 %636, %v20
  %v638 = vpop.permute.xlu0 %637
  %v640 = vmul.f32 %v638, %v57
  %v641 = vadd.f32 %v635, %v640
  %642 = vset.pattern.permute.xlu0 17
  %643 = vperm.xlu0 %642, %v20
  %v644 = vpop.permute.xlu0 %643
  %v646 = vmul.f32 %v644, %v67
  %v647 = vadd.f32 %v641, %v646
  %649 = vrot.lane.b32.xlu0 %v629, 32
  %v650 = vpop.permute.xlu0 %649
  %v651 = vsel %vm70, %v650, 0
  %653 = vmatprep.subr.mxu0 0.0
  %654 = vmatpush1.msra.mxu0 %v21
  %655 = vmatprep.subr.mxu0 0.0
  %656 = vmatpush1.msra.mxu0 %v22
  %657 = vmatprep.subr.mxu0 0.0
  %658 = vmatpush1.msra.mxu0 %v23
  %659 = vmatprep.subr.mxu0 0.0
  %660 = vmatpush1.msra.mxu0 %v24
  %661 = vmatprep.subr.mxu0 0.0
  %662 = vmatpush1.msra.mxu0 0.0
  %663 = vmatprep.subr.mxu0 0.0
  %664 = vmatpush1.msra.mxu0 0.0
  %665 = vmatprep.subr.mxu0 0.0
  %666 = vmatpush1.msra.mxu0 0.0
  %667 = vmatprep.subr.mxu0 0.0
  %668 = vmatpush1.msra.mxu0 0.0
  %669 = vmatprep.subr.mxu0 0.0
  %670 = vmatpush1.msra.mxu0 0.0
  %671 = vmatprep.subr.mxu0 0.0
  %672 = vmatpush1.msra.mxu0 0.0
  %673 = vmatprep.subr.mxu0 0.0
  %674 = vmatpush1.msra.mxu0 0.0
  %675 = vmatprep.subr.mxu0 0.0
  %676 = vmatpush1.msra.mxu0 0.0
  %677 = vmatprep.subr.mxu0 0.0
  %678 = vmatpush1.msra.mxu0 0.0
  %679 = vmatprep.subr.mxu0 0.0
  %680 = vmatpush1.msra.mxu0 0.0
  %681 = vmatprep.subr.mxu0 0.0
  %682 = vmatpush1.msra.mxu0 0.0
  %683 = vmatprep.subr.mxu0 0.0
  %684 = vmatpush1.msra.mxu0 0.0
  %685 = vmatprep.subr.mxu0 0.0
  %686 = vmatpush1.msra.mxu0 0.0
  %687 = vmatprep.subr.mxu0 0.0
  %688 = vmatpush1.msra.mxu0 0.0
  %689 = vmatprep.subr.mxu0 0.0
  %690 = vmatpush1.msra.mxu0 0.0
  %691 = vmatprep.subr.mxu0 0.0
  %692 = vmatpush1.msra.mxu0 0.0
  %693 = vmatprep.subr.mxu0 0.0
  %694 = vmatpush1.msra.mxu0 0.0
  %695 = vmatprep.subr.mxu0 0.0
  %696 = vmatpush1.msra.mxu0 0.0
  %697 = vmatprep.subr.mxu0 0.0
  %698 = vmatpush1.msra.mxu0 0.0
  %699 = vmatprep.subr.mxu0 0.0
  %700 = vmatpush1.msra.mxu0 0.0
  %701 = vmatprep.subr.mxu0 0.0
  %702 = vmatpush1.msra.mxu0 0.0
  %703 = vmatprep.subr.mxu0 0.0
  %704 = vmatpush1.msra.mxu0 0.0
  %705 = vmatprep.subr.mxu0 0.0
  %706 = vmatpush1.msra.mxu0 0.0
  %707 = vmatprep.subr.mxu0 0.0
  %708 = vmatpush1.msra.mxu0 0.0
  %709 = vmatprep.subr.mxu0 0.0
  %710 = vmatpush1.msra.mxu0 0.0
  %711 = vmatprep.subr.mxu0 0.0
  %712 = vmatpush1.msra.mxu0 0.0
  %713 = vmatprep.subr.mxu0 0.0
  %714 = vmatpush1.msra.mxu0 0.0
  %715 = vmatprep.subr.mxu0 0.0
  %716 = vmatpush1.msra.mxu0 0.0
  %717 = vmatprep.mubr.f32.mxu0 0.0
  %718 = vmatmul.mubr.f32.gmra.mrb[0].mxu0 %v651
  %v719 = vpop.f32.mrb[0].mxu0
  %v720 = vadd.f32 0.0, %v719
  %v721 = vpop.f32.mrb[0].mxu0
  %722 = vdwg.mxu0
  %v723 = vadd.f32 %v647, %v720
  %v724 = vmul.f32 %v723, %v31
  %v725 = vtanh.pop %v724
  %v726 = vmul.f32 %v725, %v31
  %v727 = vadd.f32 %v726, %v32
  %v728 = vmul.f32 %v727, %v623
  %730 = vrot.lane.b32.xlu0 %v727, 64
  %v731 = vpop.permute.xlu0 %730
  %v733 = vmul.f32 %v727, %v731
  %735 = vrot.lane.b32.xlu0 %v733, 32
  %v736 = vpop.permute.xlu0 %735
  %v738 = vadd.f32 %v728, %v736
  %v739 = vtanh.pop %v738
  %741 = vrot.lane.b32.xlu0 %v739, 64
  %v742 = vpop.permute.xlu0 %741
  %v744 = vmul.f32 %v727, %v742
  %745 = vset.pattern.permute.xlu0 18
  %746 = vperm.xlu0 %745, %v20
  %v747 = vpop.permute.xlu0 %746
  %v749 = vmul.f32 %v747, %v43
  %v750 = vadd.f32 %v48, %v749
  %751 = vset.pattern.permute.xlu0 19
  %752 = vperm.xlu0 %751, %v20
  %v753 = vpop.permute.xlu0 %752
  %v755 = vmul.f32 %v753, %v57
  %v756 = vadd.f32 %v750, %v755
  %757 = vset.pattern.permute.xlu0 20
  %758 = vperm.xlu0 %757, %v20
  %v759 = vpop.permute.xlu0 %758
  %v761 = vmul.f32 %v759, %v67
  %v762 = vadd.f32 %v756, %v761
  %764 = vrot.lane.b32.xlu0 %v744, 32
  %v765 = vpop.permute.xlu0 %764
  %v766 = vsel %vm70, %v765, 0
  %768 = vmatprep.subr.mxu0 0.0
  %769 = vmatpush1.msra.mxu0 %v21
  %770 = vmatprep.subr.mxu0 0.0
  %771 = vmatpush1.msra.mxu0 %v22
  %772 = vmatprep.subr.mxu0 0.0
  %773 = vmatpush1.msra.mxu0 %v23
  %774 = vmatprep.subr.mxu0 0.0
  %775 = vmatpush1.msra.mxu0 %v24
  %776 = vmatprep.subr.mxu0 0.0
  %777 = vmatpush1.msra.mxu0 0.0
  %778 = vmatprep.subr.mxu0 0.0
  %779 = vmatpush1.msra.mxu0 0.0
  %780 = vmatprep.subr.mxu0 0.0
  %781 = vmatpush1.msra.mxu0 0.0
  %782 = vmatprep.subr.mxu0 0.0
  %783 = vmatpush1.msra.mxu0 0.0
  %784 = vmatprep.subr.mxu0 0.0
  %785 = vmatpush1.msra.mxu0 0.0
  %786 = vmatprep.subr.mxu0 0.0
  %787 = vmatpush1.msra.mxu0 0.0
  %788 = vmatprep.subr.mxu0 0.0
  %789 = vmatpush1.msra.mxu0 0.0
  %790 = vmatprep.subr.mxu0 0.0
  %791 = vmatpush1.msra.mxu0 0.0
  %792 = vmatprep.subr.mxu0 0.0
  %793 = vmatpush1.msra.mxu0 0.0
  %794 = vmatprep.subr.mxu0 0.0
  %795 = vmatpush1.msra.mxu0 0.0
  %796 = vmatprep.subr.mxu0 0.0
  %797 = vmatpush1.msra.mxu0 0.0
  %798 = vmatprep.subr.mxu0 0.0
  %799 = vmatpush1.msra.mxu0 0.0
  %800 = vmatprep.subr.mxu0 0.0
  %801 = vmatpush1.msra.mxu0 0.0
  %802 = vmatprep.subr.mxu0 0.0
  %803 = vmatpush1.msra.mxu0 0.0
  %804 = vmatprep.subr.mxu0 0.0
  %805 = vmatpush1.msra.mxu0 0.0
  %806 = vmatprep.subr.mxu0 0.0
  %807 = vmatpush1.msra.mxu0 0.0
  %808 = vmatprep.subr.mxu0 0.0
  %809 = vmatpush1.msra.mxu0 0.0
  %810 = vmatprep.subr.mxu0 0.0
  %811 = vmatpush1.msra.mxu0 0.0
  %812 = vmatprep.subr.mxu0 0.0
  %813 = vmatpush1.msra.mxu0 0.0
  %814 = vmatprep.subr.mxu0 0.0
  %815 = vmatpush1.msra.mxu0 0.0
  %816 = vmatprep.subr.mxu0 0.0
  %817 = vmatpush1.msra.mxu0 0.0
  %818 = vmatprep.subr.mxu0 0.0
  %819 = vmatpush1.msra.mxu0 0.0
  %820 = vmatprep.subr.mxu0 0.0
  %821 = vmatpush1.msra.mxu0 0.0
  %822 = vmatprep.subr.mxu0 0.0
  %823 = vmatpush1.msra.mxu0 0.0
  %824 = vmatprep.subr.mxu0 0.0
  %825 = vmatpush1.msra.mxu0 0.0
  %826 = vmatprep.subr.mxu0 0.0
  %827 = vmatpush1.msra.mxu0 0.0
  %828 = vmatprep.subr.mxu0 0.0
  %829 = vmatpush1.msra.mxu0 0.0
  %830 = vmatprep.subr.mxu0 0.0
  %831 = vmatpush1.msra.mxu0 0.0
  %832 = vmatprep.mubr.f32.mxu0 0.0
  %833 = vmatmul.mubr.f32.gmra.mrb[0].mxu0 %v766
  %v834 = vpop.f32.mrb[0].mxu0
  %v835 = vadd.f32 0.0, %v834
  %v836 = vpop.f32.mrb[0].mxu0
  %837 = vdwg.mxu0
  %v838 = vadd.f32 %v762, %v835
  %v839 = vmul.f32 %v838, %v31
  %v840 = vtanh.pop %v839
  %v841 = vmul.f32 %v840, %v31
  %v842 = vadd.f32 %v841, %v32
  %v843 = vmul.f32 %v842, %v738
  %845 = vrot.lane.b32.xlu0 %v842, 64
  %v846 = vpop.permute.xlu0 %845
  %v848 = vmul.f32 %v842, %v846
  %850 = vrot.lane.b32.xlu0 %v848, 32
  %v851 = vpop.permute.xlu0 %850
  %v853 = vadd.f32 %v843, %v851
  %v854 = vtanh.pop %v853
  %856 = vrot.lane.b32.xlu0 %v854, 64
  %v857 = vpop.permute.xlu0 %856
  %v859 = vmul.f32 %v842, %v857
  %860 = vset.pattern.permute.xlu0 21
  %861 = vperm.xlu0 %860, %v20
  %v862 = vpop.permute.xlu0 %861
  %v864 = vmul.f32 %v862, %v43
  %v865 = vadd.f32 %v48, %v864
  %866 = vset.pattern.permute.xlu0 22
  %867 = vperm.xlu0 %866, %v20
  %v868 = vpop.permute.xlu0 %867
  %v870 = vmul.f32 %v868, %v57
  %v871 = vadd.f32 %v865, %v870
  %872 = vset.pattern.permute.xlu0 23
  %873 = vperm.xlu0 %872, %v20
  %v874 = vpop.permute.xlu0 %873
  %v876 = vmul.f32 %v874, %v67
  %v877 = vadd.f32 %v871, %v876
  %879 = vrot.lane.b32.xlu0 %v859, 32
  %v880 = vpop.permute.xlu0 %879
  %v881 = vsel %vm70, %v880, 0
  %883 = vmatprep.subr.mxu0 0.0
  %884 = vmatpush1.msra.mxu0 %v21
  %885 = vmatprep.subr.mxu0 0.0
  %886 = vmatpush1.msra.mxu0 %v22
  %887 = vmatprep.subr.mxu0 0.0
  %888 = vmatpush1.msra.mxu0 %v23
  %889 = vmatprep.subr.mxu0 0.0
  %890 = vmatpush1.msra.mxu0 %v24
  %891 = vmatprep.subr.mxu0 0.0
  %892 = vmatpush1.msra.mxu0 0.0
  %893 = vmatprep.subr.mxu0 0.0
  %894 = vmatpush1.msra.mxu0 0.0
  %895 = vmatprep.subr.mxu0 0.0
  %896 = vmatpush1.msra.mxu0 0.0
  %897 = vmatprep.subr.mxu0 0.0
  %898 = vmatpush1.msra.mxu0 0.0
  %899 = vmatprep.subr.mxu0 0.0
  %900 = vmatpush1.msra.mxu0 0.0
  %901 = vmatprep.subr.mxu0 0.0
  %902 = vmatpush1.msra.mxu0 0.0
  %903 = vmatprep.subr.mxu0 0.0
  %904 = vmatpush1.msra.mxu0 0.0
  %905 = vmatprep.subr.mxu0 0.0
  %906 = vmatpush1.msra.mxu0 0.0
  %907 = vmatprep.subr.mxu0 0.0
  %908 = vmatpush1.msra.mxu0 0.0
  %909 = vmatprep.subr.mxu0 0.0
  %910 = vmatpush1.msra.mxu0 0.0
  %911 = vmatprep.subr.mxu0 0.0
  %912 = vmatpush1.msra.mxu0 0.0
  %913 = vmatprep.subr.mxu0 0.0
  %914 = vmatpush1.msra.mxu0 0.0
  %915 = vmatprep.subr.mxu0 0.0
  %916 = vmatpush1.msra.mxu0 0.0
  %917 = vmatprep.subr.mxu0 0.0
  %918 = vmatpush1.msra.mxu0 0.0
  %919 = vmatprep.subr.mxu0 0.0
  %920 = vmatpush1.msra.mxu0 0.0
  %921 = vmatprep.subr.mxu0 0.0
  %922 = vmatpush1.msra.mxu0 0.0
  %923 = vmatprep.subr.mxu0 0.0
  %924 = vmatpush1.msra.mxu0 0.0
  %925 = vmatprep.subr.mxu0 0.0
  %926 = vmatpush1.msra.mxu0 0.0
  %927 = vmatprep.subr.mxu0 0.0
  %928 = vmatpush1.msra.mxu0 0.0
  %929 = vmatprep.subr.mxu0 0.0
  %930 = vmatpush1.msra.mxu0 0.0
  %931 = vmatprep.subr.mxu0 0.0
  %932 = vmatpush1.msra.mxu0 0.0
  %933 = vmatprep.subr.mxu0 0.0
  %934 = vmatpush1.msra.mxu0 0.0
  %935 = vmatprep.subr.mxu0 0.0
  %936 = vmatpush1.msra.mxu0 0.0
  %937 = vmatprep.subr.mxu0 0.0
  %938 = vmatpush1.msra.mxu0 0.0
  %939 = vmatprep.subr.mxu0 0.0
  %940 = vmatpush1.msra.mxu0 0.0
  %941 = vmatprep.subr.mxu0 0.0
  %942 = vmatpush1.msra.mxu0 0.0
  %943 = vmatprep.subr.mxu0 0.0
  %944 = vmatpush1.msra.mxu0 0.0
  %945 = vmatprep.subr.mxu0 0.0
  %946 = vmatpush1.msra.mxu0 0.0
  %947 = vmatprep.mubr.f32.mxu0 0.0
  %948 = vmatmul.mubr.f32.gmra.mrb[0].mxu0 %v881
  %v949 = vpop.f32.mrb[0].mxu0
  %v950 = vadd.f32 0.0, %v949
  %v951 = vpop.f32.mrb[0].mxu0
  %952 = vdwg.mxu0
  %v953 = vadd.f32 %v877, %v950
  %v954 = vmul.f32 %v953, %v31
  %v955 = vtanh.pop %v954
  %v956 = vmul.f32 %v955, %v31
  %v957 = vadd.f32 %v956, %v32
  %v958 = vmul.f32 %v957, %v853
  %960 = vrot.lane.b32.xlu0 %v957, 64
  %v961 = vpop.permute.xlu0 %960
  %v963 = vmul.f32 %v957, %v961
  %965 = vrot.lane.b32.xlu0 %v963, 32
  %v966 = vpop.permute.xlu0 %965
  %v968 = vadd.f32 %v958, %v966
  %v969 = vtanh.pop %v968
  %971 = vrot.lane.b32.xlu0 %v969, 64
  %v972 = vpop.permute.xlu0 %971
  %v974 = vmul.f32 %v957, %v972
  %v975 = vld [vmem:[%s4] sm:$0xff]
  %v976 = vld [vmem:[%s4 + $0x8] sm:$0xff]
  %v977 = vld [vmem:[%s4 + $0x10] sm:$0xff]
  %v978 = vld [vmem:[%s4 + $0x18] sm:$0xff]
  %v979 = vld [vmem:[%s4 + $0x20] sm:$0x7]
  %v980 = vlaneseq
  %v981 = vshrl.u32 %v980, 7
  %v982 = vsub.s32 0, %v981
  %v983 = vrot.slane %v979, %v982
  %985 = vrot.lane.b32.xlu0 %v974, 32
  %v986 = vpop.permute.xlu0 %985
  %v987 = vsel %vm70, %v986, 0
  %989 = vmatprep.subr.mxu0 0.0
  %990 = vmatpush1.msra.mxu0 %v975
  %991 = vmatprep.subr.mxu0 0.0
  %992 = vmatpush1.msra.mxu0 %v976
  %993 = vmatprep.subr.mxu0 0.0
  %994 = vmatpush1.msra.mxu0 %v977
  %995 = vmatprep.subr.mxu0 0.0
  %996 = vmatpush1.msra.mxu0 %v978
  %997 = vmatprep.subr.mxu0 0.0
  %998 = vmatpush1.msra.mxu0 0.0
  %999 = vmatprep.subr.mxu0 0.0
  %1000 = vmatpush1.msra.mxu0 0.0
  %1001 = vmatprep.subr.mxu0 0.0
  %1002 = vmatpush1.msra.mxu0 0.0
  %1003 = vmatprep.subr.mxu0 0.0
  %1004 = vmatpush1.msra.mxu0 0.0
  %1005 = vmatprep.subr.mxu0 0.0
  %1006 = vmatpush1.msra.mxu0 0.0
  %1007 = vmatprep.subr.mxu0 0.0
  %1008 = vmatpush1.msra.mxu0 0.0
  %1009 = vmatprep.subr.mxu0 0.0
  %1010 = vmatpush1.msra.mxu0 0.0
  %1011 = vmatprep.subr.mxu0 0.0
  %1012 = vmatpush1.msra.mxu0 0.0
  %1013 = vmatprep.subr.mxu0 0.0
  %1014 = vmatpush1.msra.mxu0 0.0
  %1015 = vmatprep.subr.mxu0 0.0
  %1016 = vmatpush1.msra.mxu0 0.0
  %1017 = vmatprep.subr.mxu0 0.0
  %1018 = vmatpush1.msra.mxu0 0.0
  %1019 = vmatprep.subr.mxu0 0.0
  %1020 = vmatpush1.msra.mxu0 0.0
  %1021 = vmatprep.subr.mxu0 0.0
  %1022 = vmatpush1.msra.mxu0 0.0
  %1023 = vmatprep.subr.mxu0 0.0
  %1024 = vmatpush1.msra.mxu0 0.0
  %1025 = vmatprep.subr.mxu0 0.0
  %1026 = vmatpush1.msra.mxu0 0.0
  %1027 = vmatprep.subr.mxu0 0.0
  %1028 = vmatpush1.msra.mxu0 0.0
  %1029 = vmatprep.subr.mxu0 0.0
  %1030 = vmatpush1.msra.mxu0 0.0
  %1031 = vmatprep.subr.mxu0 0.0
  %1032 = vmatpush1.msra.mxu0 0.0
  %1033 = vmatprep.subr.mxu0 0.0
  %1034 = vmatpush1.msra.mxu0 0.0
  %1035 = vmatprep.subr.mxu0 0.0
  %1036 = vmatpush1.msra.mxu0 0.0
  %1037 = vmatprep.subr.mxu0 0.0
  %1038 = vmatpush1.msra.mxu0 0.0
  %1039 = vmatprep.subr.mxu0 0.0
  %1040 = vmatpush1.msra.mxu0 0.0
  %1041 = vmatprep.subr.mxu0 0.0
  %1042 = vmatpush1.msra.mxu0 0.0
  %1043 = vmatprep.subr.mxu0 0.0
  %1044 = vmatpush1.msra.mxu0 0.0
  %1045 = vmatprep.subr.mxu0 0.0
  %1046 = vmatpush1.msra.mxu0 0.0
  %1047 = vmatprep.subr.mxu0 0.0
  %1048 = vmatpush1.msra.mxu0 0.0
  %1049 = vmatprep.subr.mxu0 0.0
  %1050 = vmatpush1.msra.mxu0 0.0
  %1051 = vmatprep.subr.mxu0 0.0
  %1052 = vmatpush1.msra.mxu0 0.0
  %1053 = vmatprep.mubr.f32.mxu0 0.0
  %1054 = vmatmul.mubr.f32.gmra.mrb[0].mxu0 %v987
  %v1055 = vpop.f32.mrb[0].mxu0
  %v1056 = vadd.f32 %v983, %v1055
  %v1057 = vpop.f32.mrb[0].mxu0
  %1058 = vdwg.mxu0
  %v1059 = vmax.f32 %v1056, 0.0
  %v1060 = vlaneseq
  %v1061 = vshrl.u32 %v1060, 7
  %v1062 = vsub.s32 1, %v1061
  %v1063 = vrot.slane %v979, %v1062
  %v1064 = vmul.f32 %v1059, %v1063
  %vm1065 = vcmask 195584
  %v1066 = vsel %vm1065, %v1064, 0.0
  %1067 = vadd.xlane.f32.xlu0 %v1066
  %v1068 = vpop.xlane.xlu0 %1067
  %v1069 = vlaneseq
  %v1070 = vshrl.u32 %v1069, 7
  %v1071 = vsub.s32 2, %v1070
  %v1072 = vrot.slane %v979, %v1071
  %v1073 = vadd.f32 %v1068, %v1072
  %v1074 = vtanh.pop %v1073
  %vm1075 = vcmask 7168
  %1076 = vst.msk [vmem:[%s5] sm:$0xff] %vm1075, %v1074
  // Predicated region
  $region22: #{notestart_forward.1} parent=0 // pred_check
    _
  $region23: #{notestart_forward.1} parent=0 // pred_check_branch
    %1078 = sbr.rel (0) target = $region25
  $region24: #{notestart_forward.1} parent=0 // pred_region
    _
  $region25: #{notestart_forward.1} parent=0 // pred_fallthru
    _
  // Predicated region
  $region26: #{notestart_forward.1} parent=0 // pred_check
    _
  $region27: #{notestart_forward.1} parent=0 // pred_check_branch
    %1080 = sbr.rel (0) target = $region29
  $region28: #{notestart_forward.1} parent=0 // pred_region
    _
  $region29: #{notestart_forward.1} parent=0 // pred_fallthru
    _

</llo_original>
